<compile_context>
chip_gen: v5e
topology: v5e:2x2
jax: 0.10.0
libtpu: 0.0.40
codegen_flags: <defaults>
</compile_context>

<pallas_src>
import jax
import jax.numpy as jnp
import numpy as np
from jax import lax
from jax.experimental import pallas as pl
from jax.experimental.pallas import tpu as pltpu


LANE = 128       # padded hidden width (one full 128-lane block per gate)
SUBLANE = 8      # padded batch (sublane) width
NUM_LAYERS = 3
# Packed gate block p holds PyTorch gate GATE_PERM[p]; PyTorch order is (i,f,g,o),
# packed order is (i,f,o,g) so the three sigmoid gates are contiguous.
GATE_PERM = (0, 1, 3, 2)


# ----------------------------------------------------------------------------
# Fused Pallas kernel: one grid step per LSTM layer; last step also runs Linear
# ----------------------------------------------------------------------------
def fused_lstm_kernel(x_ref, wih_ref, whh_ref, b_ref, wfc_ref, bfc_ref,
                      out_ref, seq_sc, gates_sc, h_sc, c_sc):
    """
    x_ref   : (T, Bp, Hp)   padded input sequence (constant block -> DMA'd once)
    wih_ref : (1, Hp, 4Hp)  this layer's input->gate weights (bf16, pre-transposed)
    whh_ref : (1, Hp, 4Hp)  this layer's hidden->gate weights (bf16, pre-transposed)
    b_ref   : (1, 1, 4Hp)   this layer's combined bias b_ih + b_hh (f32)
    wfc_ref : (Hp, Dp)      final Linear weight (bf16, pre-transposed)
    bfc_ref : (1, Dp)       final Linear bias (f32)
    out_ref : (T, Bp, Dp)   lane-dense output slab (written only on last layer)
    seq_sc  : (T, Bp, Hp)   f32 hidden-sequence slab, persists across grid steps
    gates_sc: (T, Bp, 4Hp)  f32 hoisted input-projection gates for this layer
    h_sc,c_sc: (Bp, Hp)     f32 recurrent state
    """
    layer = pl.program_id(0)
    T, Bp, Hp = seq_sc.shape

    # On the first layer, seed the sequence slab with the (already padded) input.
    @pl.when(layer == 0)
    def _():
        seq_sc[...] = x_ref[...]

    wih = wih_ref[0]          # (Hp, 4Hp) bf16
    whh = whh_ref[0]          # (Hp, 4Hp) bf16
    bias = b_ref[0]           # (1, 4Hp)  f32

    # ---- hoisted input projection: one batched MXU matmul over all T ----------
    gates_sc[...] = (
        jnp.einsum("tbi,ig->tbg", seq_sc[...].astype(jnp.bfloat16), wih,
                   preferred_element_type=jnp.float32)
        + bias
    )

    # ---- serial recurrence over time (statically unrolled, T small) -----------
    h_sc[...] = jnp.zeros_like(h_sc)
    c_sc[...] = jnp.zeros_like(c_sc)
    for t in range(T):
        gates = gates_sc[t] + jnp.dot(
            h_sc[...].astype(jnp.bfloat16), whh,
            preferred_element_type=jnp.float32)
        # packed gate order i, f, o, g: one fused sigmoid over the 3 contiguous
        # sigmoid gates, one tanh over the candidate gate (all f32 on VPU/EUP)
        sig = jax.nn.sigmoid(gates[:, :3 * Hp])
        g_g = jnp.tanh(gates[:, 3 * Hp:])
        i_g = sig[:, 0 * Hp:1 * Hp]
        f_g = sig[:, 1 * Hp:2 * Hp]
        o_g = sig[:, 2 * Hp:3 * Hp]
        c_new = f_g * c_sc[...] + i_g * g_g
        h_new = o_g * jnp.tanh(c_new)
        c_sc[...] = c_new
        h_sc[...] = h_new
        seq_sc[t] = h_new                     # overwrite input slab in place

    # dropout: identity in eval mode
    # ---- final Linear over the whole sequence, only on the last layer ---------
    @pl.when(layer == pl.num_programs(0) - 1)
    def _():
        out_ref[...] = (
            jnp.einsum("tbh,hd->tbd", seq_sc[...].astype(jnp.bfloat16),
                       wfc_ref[...], preferred_element_type=jnp.float32)
            + bfc_ref[...]
        )


# ----------------------------------------------------------------------------
# One-time parameter packing: transpose + pad + lane-align gates + fold biases
# ----------------------------------------------------------------------------
def pack_params(params, input_size, hidden_units):
    Hp, Dp = LANE, LANE
    G = 4 * Hp
    in_sizes = [input_size] + list(hidden_units[:-1])

    wih_all = np.zeros((NUM_LAYERS, Hp, G), np.float32)
    whh_all = np.zeros((NUM_LAYERS, Hp, G), np.float32)
    b_all = np.zeros((NUM_LAYERS, 1, G), np.float32)

    for l, name in enumerate(("lstm1", "lstm2", "lstm3")):
        p = params[name]
        w_ih = np.asarray(p["w_ih"])          # (4H, In), PyTorch gate order i,f,g,o
        w_hh = np.asarray(p["w_hh"])          # (4H, H)
        bias = np.asarray(p["b_ih"]) + np.asarray(p["b_hh"])
        in_sz, h = in_sizes[l], hidden_units[l]
        assert in_sz <= Hp and h <= Hp
        for pos, src in enumerate(GATE_PERM):
            rows = slice(src * h, (src + 1) * h)
            wih_all[l, :in_sz, pos * Hp:pos * Hp + h] = w_ih[rows, :].T
            whh_all[l, :h,     pos * Hp:pos * Hp + h] = w_hh[rows, :].T
            b_all[l, 0, pos * Hp:pos * Hp + h] = bias[rows]

    w_fc = np.asarray(params["fc"]["w"])      # (D_out, H_last)
    b_fc = np.asarray(params["fc"]["b"])      # (D_out,)
    d_out, h_last = int(w_fc.shape[0]), hidden_units[-1]
    assert d_out <= Dp and h_last <= Hp
    wfc_pad = np.zeros((Hp, Dp), np.float32)
    wfc_pad[:h_last, :d_out] = w_fc.T
    bfc_pad = np.zeros((1, Dp), np.float32)
    bfc_pad[0, :d_out] = b_fc

    # Invariant: padded rows / gate lanes / bias lanes must be exactly zero so the
    # padded hidden lanes stay 0 through the recurrence (tanh gate pad -> g=0 -> h=0).
    for l in range(NUM_LAYERS):
        h = hidden_units[l]
        for pos in range(4):
            assert not wih_all[l, :, pos * Hp + h:(pos + 1) * Hp].any()
            assert not whh_all[l, :, pos * Hp + h:(pos + 1) * Hp].any()
            assert not b_all[l, 0, pos * Hp + h:(pos + 1) * Hp].any()
        assert not wih_all[l, in_sizes[l]:, :].any()
        assert not whh_all[l, h:, :].any()
    assert not wfc_pad[h_last:, :].any() and not wfc_pad[:, d_out:].any()
    assert not bfc_pad[0, d_out:].any()

    packed = {
        "wih": jnp.asarray(wih_all).astype(jnp.bfloat16),
        "whh": jnp.asarray(whh_all).astype(jnp.bfloat16),
        "b": jnp.asarray(b_all, jnp.float32),
        "wfc": jnp.asarray(wfc_pad).astype(jnp.bfloat16),
        "bfc": jnp.asarray(bfc_pad, jnp.float32),
    }
    return packed, d_out


# ----------------------------------------------------------------------------
# Forward wrapper
# ----------------------------------------------------------------------------
def lstm_model_forward(x, packed, d_out):
    """x: (B, T, input_size) batch-first, as in the PyTorch module."""
    B, T, D_in = x.shape
    Bp, Hp, Dp = SUBLANE, LANE, LANE
    G = 4 * Hp
    assert B <= Bp and D_in <= Hp

    # time-major, zero-pad batch -> 8 sublanes, features -> 128 lanes
    x_tm = jnp.transpose(x, (1, 0, 2)).astype(jnp.float32)             # (T, B, D_in)
    x_pad = jnp.zeros((T, Bp, Hp), jnp.float32).at[:, :B, :D_in].set(x_tm)

    out_pad = pl.pallas_call(
        fused_lstm_kernel,
        out_shape=jax.ShapeDtypeStruct((T, Bp, Dp), jnp.float32),
        grid_spec=pltpu.PrefetchScalarGridSpec(
            num_scalar_prefetch=0,
            grid=(NUM_LAYERS,),                          # one grid step per layer
            in_specs=[
                pl.BlockSpec((T, Bp, Hp), lambda l: (0, 0, 0)),   # input (fetched once)
                pl.BlockSpec((1, Hp, G), lambda l: (l, 0, 0)),    # per-layer W_ih
                pl.BlockSpec((1, Hp, G), lambda l: (l, 0, 0)),    # per-layer W_hh
                pl.BlockSpec((1, 1, G), lambda l: (l, 0, 0)),     # per-layer bias
                pl.BlockSpec((Hp, Dp), lambda l: (0, 0)),         # fc weight
                pl.BlockSpec((1, Dp), lambda l: (0, 0)),          # fc bias
            ],
            out_specs=pl.BlockSpec((T, Bp, Dp), lambda l: (0, 0, 0)),
            scratch_shapes=[
                pltpu.VMEM((T, Bp, Hp), jnp.float32),   # hidden-sequence slab
                pltpu.VMEM((T, Bp, G), jnp.float32),    # hoisted input-projection gates
                pltpu.VMEM((Bp, Hp), jnp.float32),      # h state
                pltpu.VMEM((Bp, Hp), jnp.float32),      # c state
            ],
        ),
        compiler_params=pltpu.CompilerParams(
            dimension_semantics=("arbitrary",)),        # layers are serially dependent
    )(x_pad, packed["wih"], packed["whh"], packed["b"],
      packed["wfc"], packed["bfc"])

    # strip padding (fc OUTPUT dim, not input_size), back to batch-first
    return jnp.transpose(out_pad[:, :B, :d_out], (1, 0, 2))


# ----------------------------------------------------------------------------
# Pure-JAX f32 reference (for correctness check)
# ----------------------------------------------------------------------------
def lstm_layer_ref(x_tm, w_ih, w_hh, b_ih, b_hh):
    B = x_tm.shape[1]
    H = w_hh.shape[1]

    def step(carry, x_t):
        h, c = carry
        gates = x_t @ w_ih.T + b_ih + h @ w_hh.T + b_hh
        i, f, g, o = jnp.split(gates, 4, axis=-1)
        i, f, o = jax.nn.sigmoid(i), jax.nn.sigmoid(f), jax.nn.sigmoid(o)
        g = jnp.tanh(g)
        c = f * c + i * g
        h = o * jnp.tanh(c)
        return (h, c), h

    init = (jnp.zeros((B, H), jnp.float32), jnp.zeros((B, H), jnp.float32))
    _, hs = lax.scan(step, init, x_tm)
    return hs


def lstm_model_ref(x, params):
    x_tm = jnp.transpose(x, (1, 0, 2)).astype(jnp.float32)
    for layer in ("lstm1", "lstm2", "lstm3"):
        p = params[layer]
        x_tm = lstm_layer_ref(x_tm, p["w_ih"], p["w_hh"], p["b_ih"], p["b_hh"])
    y_tm = jnp.einsum("tbh,dh->tbd", x_tm, params["fc"]["w"]) + params["fc"]["b"]
    return jnp.transpose(y_tm, (1, 0, 2))


# ----------------------------------------------------------------------------
# Deterministic parameter init (PyTorch-style uniform(-1/sqrt(H), 1/sqrt(H)))
# ----------------------------------------------------------------------------
def init_params(key, input_size, hidden_units):
    params = {}
    sizes_in = [input_size] + list(hidden_units[:-1])
    for idx, (in_sz, h) in enumerate(zip(sizes_in, hidden_units), start=1):
        k = 1.0 / np.sqrt(h)
        key, k1, k2, k3, k4 = jax.random.split(key, 5)
        params[f"lstm{idx}"] = {
            "w_ih": jax.random.uniform(k1, (4 * h, in_sz), jnp.float32, -k, k),
            "w_hh": jax.random.uniform(k2, (4 * h, h), jnp.float32, -k, k),
            "b_ih": jax.random.uniform(k3, (4 * h,), jnp.float32, -k, k),
            "b_hh": jax.random.uniform(k4, (4 * h,), jnp.float32, -k, k),
        }
    h_last = hidden_units[-1]
    k = 1.0 / np.sqrt(h_last)
    key, k1, k2 = jax.random.split(key, 3)
    params["fc"] = {
        "w": jax.random.uniform(k1, (input_size, h_last), jnp.float32, -k, k),
        "b": jax.random.uniform(k2, (input_size,), jnp.float32, -k, k),
    }
    return params


# ----------------------------------------------------------------------------
# Main
# ----------------------------------------------------------------------------
if __name__ == "__main__":
    input_size = 16
    hidden_units = [32, 32, 32]
    dropout_rate = 0.2   # identity in eval mode
    batch, seq = 2, 8

    key = jax.random.PRNGKey(0)
    key, xk = jax.random.split(key)
    x = jax.random.normal(xk, (batch, seq, input_size), jnp.float32)

    params = init_params(key, input_size, hidden_units)
    packed, d_out = pack_params(params, input_size, hidden_units)   # one-time repack

    fwd = jax.jit(lstm_model_forward, static_argnums=(2,))
    out = jax.block_until_ready(fwd(x, packed, d_out))

    ref = jax.block_until_ready(lstm_model_ref(x, params))
    assert out.shape == (batch, seq, d_out)
    # bf16 MXU operands with f32 accumulation -> looser tolerance than pure f32
    np.testing.assert_allclose(np.asarray(out), np.asarray(ref), rtol=2e-2, atol=2e-2)

    print("KERNEL_OK")
</pallas_src>

<mosaic_0001>
module attributes {stable_mosaic.version = 11 : i64} {
  func.func @fused_lstm_kernel(%arg0: i32, %arg1: memref<8x8x128xf32, #tpu.memory_space<vmem>>, %arg2: memref<1x128x512xbf16, #tpu.memory_space<vmem>>, %arg3: memref<1x128x512xbf16, #tpu.memory_space<vmem>>, %arg4: memref<1x1x512xf32, #tpu.memory_space<vmem>>, %arg5: memref<128x128xbf16, #tpu.memory_space<vmem>>, %arg6: memref<1x128xf32, #tpu.memory_space<vmem>>, %arg7: memref<8x8x128xf32, #tpu.memory_space<vmem>>, %arg8: memref<8x8x128xf32, #tpu.memory_space<vmem>>, %arg9: memref<8x8x512xf32, #tpu.memory_space<vmem>>, %arg10: memref<8x128xf32, #tpu.memory_space<vmem>>, %arg11: memref<8x128xf32, #tpu.memory_space<vmem>>) attributes {dimension_semantics = [#tpu.dimension_semantics<arbitrary>], iteration_bounds = array<i64: 3>, scalar_prefetch = 0 : i64, scratch_operands = 4 : i64, tpu.core_type = #tpu.core_type<tc>, window_params = [{pipeline_mode = #tpu.pipeline_mode<synchronous>, transform_indices = @transform_0, window_bounds = array<i64: 8, 8, 128>}, {transform_indices = @transform_1, window_bounds = array<i64: 1, 128, 512>}, {transform_indices = @transform_2, window_bounds = array<i64: 1, 128, 512>}, {transform_indices = @transform_3, window_bounds = array<i64: 1, 1, 512>}, {pipeline_mode = #tpu.pipeline_mode<synchronous>, transform_indices = @transform_4, window_bounds = array<i64: 128, 128>}, {pipeline_mode = #tpu.pipeline_mode<synchronous>, transform_indices = @transform_5, window_bounds = array<i64: 1, 128>}, {pipeline_mode = #tpu.pipeline_mode<synchronous>, transform_indices = @transform_6, window_bounds = array<i64: 8, 8, 128>}]} {
    %c0_i32 = arith.constant 0 : i32
    %0 = arith.cmpi eq, %arg0, %c0_i32 : i32
    %1 = arith.extui %0 : i1 to i32
    %c0_i32_0 = arith.constant 0 : i32
    %2 = arith.cmpi ne, %1, %c0_i32_0 : i32
    scf.if %2 {
      %c0_143 = arith.constant 0 : index
      %c0_144 = arith.constant 0 : index
      %c0_145 = arith.constant 0 : index
      %247 = vector.load %arg1[%c0_143, %c0_144, %c0_145] : memref<8x8x128xf32, #tpu.memory_space<vmem>>, vector<8x8x128xf32>
      %c0_146 = arith.constant 0 : index
      %c0_147 = arith.constant 0 : index
      %c0_148 = arith.constant 0 : index
      %248 = vector.load %arg8[%c0_146, %c0_147, %c0_148] : memref<8x8x128xf32, #tpu.memory_space<vmem>>, vector<8x8x128xf32>
      tpu.vector_store %arg8[%c0_146, %c0_147, %c0_148], %247 {strides = array<i32>} : memref<8x8x128xf32, #tpu.memory_space<vmem>>, vector<8x8x128xf32>,
    } else {
    }
    %c0 = arith.constant 0 : index
    %c0_1 = arith.constant 0 : index
    %c0_2 = arith.constant 0 : index
    %3 = vector.load %arg2[%c0, %c0_1, %c0_2] : memref<1x128x512xbf16, #tpu.memory_space<vmem>>, vector<1x128x512xbf16>
    %4 = vector.shape_cast %3 : vector<1x128x512xbf16> to vector<128x512xbf16>
    %c0_3 = arith.constant 0 : index
    %c0_4 = arith.constant 0 : index
    %c0_5 = arith.constant 0 : index
    %5 = vector.load %arg3[%c0_3, %c0_4, %c0_5] : memref<1x128x512xbf16, #tpu.memory_space<vmem>>, vector<1x128x512xbf16>
    %6 = vector.shape_cast %5 : vector<1x128x512xbf16> to vector<128x512xbf16>
    %c0_6 = arith.constant 0 : index
    %c0_7 = arith.constant 0 : index
    %c0_8 = arith.constant 0 : index
    %7 = vector.load %arg4[%c0_6, %c0_7, %c0_8] : memref<1x1x512xf32, #tpu.memory_space<vmem>>, vector<1x1x512xf32>
    %8 = vector.shape_cast %7 : vector<1x1x512xf32> to vector<1x512xf32>
    %c0_9 = arith.constant 0 : index
    %c0_10 = arith.constant 0 : index
    %c0_11 = arith.constant 0 : index
    %9 = vector.load %arg8[%c0_9, %c0_10, %c0_11] : memref<8x8x128xf32, #tpu.memory_space<vmem>>, vector<8x8x128xf32>
    %10 = arith.truncf %9 : vector<8x8x128xf32> to vector<8x8x128xbf16>
    "tpu.trace_start"() <{level = 10 : i32, message = "tbi,ig->tbg"}> : () -> ()
    %cst = arith.constant dense<0.000000e+00> : vector<8x8x512xf32>
    %11 = tpu.matmul %10, %4, %cst {dimension_numbers = #tpu.dot_dimension_numbers<[2], [0], [0, 1], [1], [0, 0, 0, 1, 1, 1], [], []>} : vector<8x8x128xbf16>, vector<128x512xbf16>, vector<8x8x512xf32> -> vector<8x8x512xf32>
    "tpu.trace_stop"() : () -> ()
    %12 = vector.shape_cast %8 : vector<1x512xf32> to vector<1x1x512xf32>
    %13 = vector.broadcast %12 : vector<1x1x512xf32> to vector<8x8x512xf32>
    %14 = arith.addf %11, %13 : vector<8x8x512xf32>
    %c0_12 = arith.constant 0 : index
    %c0_13 = arith.constant 0 : index
    %c0_14 = arith.constant 0 : index
    %15 = vector.load %arg9[%c0_12, %c0_13, %c0_14] : memref<8x8x512xf32, #tpu.memory_space<vmem>>, vector<8x8x512xf32>
    tpu.vector_store %arg9[%c0_12, %c0_13, %c0_14], %14 {strides = array<i32>} : memref<8x8x512xf32, #tpu.memory_space<vmem>>, vector<8x8x512xf32>,
    %cst_15 = arith.constant 0.000000e+00 : f32
    %16 = vector.broadcast %cst_15 : f32 to vector<8x128xf32>
    %c0_16 = arith.constant 0 : index
    %c0_17 = arith.constant 0 : index
    %17 = vector.load %arg10[%c0_16, %c0_17] : memref<8x128xf32, #tpu.memory_space<vmem>>, vector<8x128xf32>
    tpu.vector_store %arg10[%c0_16, %c0_17], %16 {strides = array<i32>} : memref<8x128xf32, #tpu.memory_space<vmem>>, vector<8x128xf32>,
    %cst_18 = arith.constant 0.000000e+00 : f32
    %18 = vector.broadcast %cst_18 : f32 to vector<8x128xf32>
    %c0_19 = arith.constant 0 : index
    %c0_20 = arith.constant 0 : index
    %19 = vector.load %arg11[%c0_19, %c0_20] : memref<8x128xf32, #tpu.memory_space<vmem>>, vector<8x128xf32>
    tpu.vector_store %arg11[%c0_19, %c0_20], %18 {strides = array<i32>} : memref<8x128xf32, #tpu.memory_space<vmem>>, vector<8x128xf32>,
    %c0_21 = arith.constant 0 : index
    %c0_22 = arith.constant 0 : index
    %c0_23 = arith.constant 0 : index
    %20 = vector.load %arg9[%c0_21, %c0_22, %c0_23] : memref<8x8x512xf32, #tpu.memory_space<vmem>>, vector<1x8x512xf32>
    %21 = vector.shape_cast %20 : vector<1x8x512xf32> to vector<8x512xf32>
    %c0_24 = arith.constant 0 : index
    %c0_25 = arith.constant 0 : index
    %22 = vector.load %arg10[%c0_24, %c0_25] : memref<8x128xf32, #tpu.memory_space<vmem>>, vector<8x128xf32>
    %23 = arith.truncf %22 : vector<8x128xf32> to vector<8x128xbf16>
    %cst_26 = arith.constant dense<0.000000e+00> : vector<8x512xf32>
    %24 = tpu.matmul %23, %6, %cst_26 {dimension_numbers = #tpu.dot_dimension_numbers<[1], [0], [0], [1], [0, 0, 1, 1], [], []>} : vector<8x128xbf16>, vector<128x512xbf16>, vector<8x512xf32> -> vector<8x512xf32>
    %25 = arith.addf %21, %24 : vector<8x512xf32>
    %26 = vector.extract_strided_slice %25 {offsets = [0, 0], sizes = [8, 384], strides = [1, 1]} : vector<8x512xf32> to vector<8x384xf32>
    %27 = arith.negf %26 : vector<8x384xf32>
    %28 = math.exp %27 : vector<8x384xf32>
    %cst_27 = arith.constant 1.000000e+00 : f32
    %29 = vector.broadcast %cst_27 : f32 to vector<8x384xf32>
    %30 = arith.addf %29, %28 : vector<8x384xf32>
    %31 = arith.divf %29, %30 : vector<8x384xf32>
    %32 = vector.extract_strided_slice %25 {offsets = [0, 384], sizes = [8, 128], strides = [1, 1]} : vector<8x512xf32> to vector<8x128xf32>
    %33 = math.tanh %32 : vector<8x128xf32>
    %34 = vector.extract_strided_slice %31 {offsets = [0, 0], sizes = [8, 128], strides = [1, 1]} : vector<8x384xf32> to vector<8x128xf32>
    %35 = vector.extract_strided_slice %31 {offsets = [0, 128], sizes = [8, 128], strides = [1, 1]} : vector<8x384xf32> to vector<8x128xf32>
    %36 = vector.extract_strided_slice %31 {offsets = [0, 256], sizes = [8, 128], strides = [1, 1]} : vector<8x384xf32> to vector<8x128xf32>
    %c0_28 = arith.constant 0 : index
    %c0_29 = arith.constant 0 : index
    %37 = vector.load %arg11[%c0_28, %c0_29] : memref<8x128xf32, #tpu.memory_space<vmem>>, vector<8x128xf32>
    %38 = arith.mulf %35, %37 : vector<8x128xf32>
    %39 = arith.mulf %34, %33 : vector<8x128xf32>
    %40 = arith.addf %38, %39 : vector<8x128xf32>
    %41 = math.tanh %40 : vector<8x128xf32>
    %42 = arith.mulf %36, %41 : vector<8x128xf32>
    %c0_30 = arith.constant 0 : index
    %c0_31 = arith.constant 0 : index
    %43 = vector.load %arg11[%c0_30, %c0_31] : memref<8x128xf32, #tpu.memory_space<vmem>>, vector<8x128xf32>
    tpu.vector_store %arg11[%c0_30, %c0_31], %40 {strides = array<i32>} : memref<8x128xf32, #tpu.memory_space<vmem>>, vector<8x128xf32>,
    %c0_32 = arith.constant 0 : index
    %c0_33 = arith.constant 0 : index
    %44 = vector.load %arg10[%c0_32, %c0_33] : memref<8x128xf32, #tpu.memory_space<vmem>>, vector<8x128xf32>
    tpu.vector_store %arg10[%c0_32, %c0_33], %42 {strides = array<i32>} : memref<8x128xf32, #tpu.memory_space<vmem>>, vector<8x128xf32>,
    %c0_34 = arith.constant 0 : index
    %c0_35 = arith.constant 0 : index
    %c0_36 = arith.constant 0 : index
    %45 = vector.load %arg8[%c0_34, %c0_35, %c0_36] : memref<8x8x128xf32, #tpu.memory_space<vmem>>, vector<1x8x128xf32>
    %46 = vector.shape_cast %45 : vector<1x8x128xf32> to vector<8x128xf32>
    %47 = vector.shape_cast %42 : vector<8x128xf32> to vector<1x8x128xf32>
    tpu.vector_store %arg8[%c0_34, %c0_35, %c0_36], %47 {strides = array<i32>} : memref<8x8x128xf32, #tpu.memory_space<vmem>>, vector<1x8x128xf32>,
    %c1 = arith.constant 1 : index
    %c0_37 = arith.constant 0 : index
    %c0_38 = arith.constant 0 : index
    %48 = vector.load %arg9[%c1, %c0_37, %c0_38] : memref<8x8x512xf32, #tpu.memory_space<vmem>>, vector<1x8x512xf32>
    %49 = vector.shape_cast %48 : vector<1x8x512xf32> to vector<8x512xf32>
    %c0_39 = arith.constant 0 : index
    %c0_40 = arith.constant 0 : index
    %50 = vector.load %arg10[%c0_39, %c0_40] : memref<8x128xf32, #tpu.memory_space<vmem>>, vector<8x128xf32>
    %51 = arith.truncf %50 : vector<8x128xf32> to vector<8x128xbf16>
    %cst_41 = arith.constant dense<0.000000e+00> : vector<8x512xf32>
    %52 = tpu.matmul %51, %6, %cst_41 {dimension_numbers = #tpu.dot_dimension_numbers<[1], [0], [0], [1], [0, 0, 1, 1], [], []>} : vector<8x128xbf16>, vector<128x512xbf16>, vector<8x512xf32> -> vector<8x512xf32>
    %53 = arith.addf %49, %52 : vector<8x512xf32>
    %54 = vector.extract_strided_slice %53 {offsets = [0, 0], sizes = [8, 384], strides = [1, 1]} : vector<8x512xf32> to vector<8x384xf32>
    %55 = arith.negf %54 : vector<8x384xf32>
    %56 = math.exp %55 : vector<8x384xf32>
    %cst_42 = arith.constant 1.000000e+00 : f32
    %57 = vector.broadcast %cst_42 : f32 to vector<8x384xf32>
    %58 = arith.addf %57, %56 : vector<8x384xf32>
    %59 = arith.divf %57, %58 : vector<8x384xf32>
    %60 = vector.extract_strided_slice %53 {offsets = [0, 384], sizes = [8, 128], strides = [1, 1]} : vector<8x512xf32> to vector<8x128xf32>
    %61 = math.tanh %60 : vector<8x128xf32>
    %62 = vector.extract_strided_slice %59 {offsets = [0, 0], sizes = [8, 128], strides = [1, 1]} : vector<8x384xf32> to vector<8x128xf32>
    %63 = vector.extract_strided_slice %59 {offsets = [0, 128], sizes = [8, 128], strides = [1, 1]} : vector<8x384xf32> to vector<8x128xf32>
    %64 = vector.extract_strided_slice %59 {offsets = [0, 256], sizes = [8, 128], strides = [1, 1]} : vector<8x384xf32> to vector<8x128xf32>
    %c0_43 = arith.constant 0 : index
    %c0_44 = arith.constant 0 : index
    %65 = vector.load %arg11[%c0_43, %c0_44] : memref<8x128xf32, #tpu.memory_space<vmem>>, vector<8x128xf32>
    %66 = arith.mulf %63, %65 : vector<8x128xf32>
    %67 = arith.mulf %62, %61 : vector<8x128xf32>
    %68 = arith.addf %66, %67 : vector<8x128xf32>
    %69 = math.tanh %68 : vector<8x128xf32>
    %70 = arith.mulf %64, %69 : vector<8x128xf32>
    %c0_45 = arith.constant 0 : index
    %c0_46 = arith.constant 0 : index
    %71 = vector.load %arg11[%c0_45, %c0_46] : memref<8x128xf32, #tpu.memory_space<vmem>>, vector<8x128xf32>
    tpu.vector_store %arg11[%c0_45, %c0_46], %68 {strides = array<i32>} : memref<8x128xf32, #tpu.memory_space<vmem>>, vector<8x128xf32>,
    %c0_47 = arith.constant 0 : index
    %c0_48 = arith.constant 0 : index
    %72 = vector.load %arg10[%c0_47, %c0_48] : memref<8x128xf32, #tpu.memory_space<vmem>>, vector<8x128xf32>
    tpu.vector_store %arg10[%c0_47, %c0_48], %70 {strides = array<i32>} : memref<8x128xf32, #tpu.memory_space<vmem>>, vector<8x128xf32>,
    %c1_49 = arith.constant 1 : index
    %c0_50 = arith.constant 0 : index
    %c0_51 = arith.constant 0 : index
    %73 = vector.load %arg8[%c1_49, %c0_50, %c0_51] : memref<8x8x128xf32, #tpu.memory_space<vmem>>, vector<1x8x128xf32>
    %74 = vector.shape_cast %73 : vector<1x8x128xf32> to vector<8x128xf32>
    %75 = vector.shape_cast %70 : vector<8x128xf32> to vector<1x8x128xf32>
    tpu.vector_store %arg8[%c1_49, %c0_50, %c0_51], %75 {strides = array<i32>} : memref<8x8x128xf32, #tpu.memory_space<vmem>>, vector<1x8x128xf32>,
    %c2 = arith.constant 2 : index
    %c0_52 = arith.constant 0 : index
    %c0_53 = arith.constant 0 : index
    %76 = vector.load %arg9[%c2, %c0_52, %c0_53] : memref<8x8x512xf32, #tpu.memory_space<vmem>>, vector<1x8x512xf32>
    %77 = vector.shape_cast %76 : vector<1x8x512xf32> to vector<8x512xf32>
    %c0_54 = arith.constant 0 : index
    %c0_55 = arith.constant 0 : index
    %78 = vector.load %arg10[%c0_54, %c0_55] : memref<8x128xf32, #tpu.memory_space<vmem>>, vector<8x128xf32>
    %79 = arith.truncf %78 : vector<8x128xf32> to vector<8x128xbf16>
    %cst_56 = arith.constant dense<0.000000e+00> : vector<8x512xf32>
    %80 = tpu.matmul %79, %6, %cst_56 {dimension_numbers = #tpu.dot_dimension_numbers<[1], [0], [0], [1], [0, 0, 1, 1], [], []>} : vector<8x128xbf16>, vector<128x512xbf16>, vector<8x512xf32> -> vector<8x512xf32>
    %81 = arith.addf %77, %80 : vector<8x512xf32>
    %82 = vector.extract_strided_slice %81 {offsets = [0, 0], sizes = [8, 384], strides = [1, 1]} : vector<8x512xf32> to vector<8x384xf32>
    %83 = arith.negf %82 : vector<8x384xf32>
    %84 = math.exp %83 : vector<8x384xf32>
    %cst_57 = arith.constant 1.000000e+00 : f32
    %85 = vector.broadcast %cst_57 : f32 to vector<8x384xf32>
    %86 = arith.addf %85, %84 : vector<8x384xf32>
    %87 = arith.divf %85, %86 : vector<8x384xf32>
    %88 = vector.extract_strided_slice %81 {offsets = [0, 384], sizes = [8, 128], strides = [1, 1]} : vector<8x512xf32> to vector<8x128xf32>
    %89 = math.tanh %88 : vector<8x128xf32>
    %90 = vector.extract_strided_slice %87 {offsets = [0, 0], sizes = [8, 128], strides = [1, 1]} : vector<8x384xf32> to vector<8x128xf32>
    %91 = vector.extract_strided_slice %87 {offsets = [0, 128], sizes = [8, 128], strides = [1, 1]} : vector<8x384xf32> to vector<8x128xf32>
    %92 = vector.extract_strided_slice %87 {offsets = [0, 256], sizes = [8, 128], strides = [1, 1]} : vector<8x384xf32> to vector<8x128xf32>
    %c0_58 = arith.constant 0 : index
    %c0_59 = arith.constant 0 : index
    %93 = vector.load %arg11[%c0_58, %c0_59] : memref<8x128xf32, #tpu.memory_space<vmem>>, vector<8x128xf32>
    %94 = arith.mulf %91, %93 : vector<8x128xf32>
    %95 = arith.mulf %90, %89 : vector<8x128xf32>
    %96 = arith.addf %94, %95 : vector<8x128xf32>
    %97 = math.tanh %96 : vector<8x128xf32>
    %98 = arith.mulf %92, %97 : vector<8x128xf32>
    %c0_60 = arith.constant 0 : index
    %c0_61 = arith.constant 0 : index
    %99 = vector.load %arg11[%c0_60, %c0_61] : memref<8x128xf32, #tpu.memory_space<vmem>>, vector<8x128xf32>
    tpu.vector_store %arg11[%c0_60, %c0_61], %96 {strides = array<i32>} : memref<8x128xf32, #tpu.memory_space<vmem>>, vector<8x128xf32>,
    %c0_62 = arith.constant 0 : index
    %c0_63 = arith.constant 0 : index
    %100 = vector.load %arg10[%c0_62, %c0_63] : memref<8x128xf32, #tpu.memory_space<vmem>>, vector<8x128xf32>
    tpu.vector_store %arg10[%c0_62, %c0_63], %98 {strides = array<i32>} : memref<8x128xf32, #tpu.memory_space<vmem>>, vector<8x128xf32>,
    %c2_64 = arith.constant 2 : index
    %c0_65 = arith.constant 0 : index
    %c0_66 = arith.constant 0 : index
    %101 = vector.load %arg8[%c2_64, %c0_65, %c0_66] : memref<8x8x128xf32, #tpu.memory_space<vmem>>, vector<1x8x128xf32>
    %102 = vector.shape_cast %101 : vector<1x8x128xf32> to vector<8x128xf32>
    %103 = vector.shape_cast %98 : vector<8x128xf32> to vector<1x8x128xf32>
    tpu.vector_store %arg8[%c2_64, %c0_65, %c0_66], %103 {strides = array<i32>} : memref<8x8x128xf32, #tpu.memory_space<vmem>>, vector<1x8x128xf32>,
    %c3 = arith.constant 3 : index
    %c0_67 = arith.constant 0 : index
    %c0_68 = arith.constant 0 : index
    %104 = vector.load %arg9[%c3, %c0_67, %c0_68] : memref<8x8x512xf32, #tpu.memory_space<vmem>>, vector<1x8x512xf32>
    %105 = vector.shape_cast %104 : vector<1x8x512xf32> to vector<8x512xf32>
    %c0_69 = arith.constant 0 : index
    %c0_70 = arith.constant 0 : index
    %106 = vector.load %arg10[%c0_69, %c0_70] : memref<8x128xf32, #tpu.memory_space<vmem>>, vector<8x128xf32>
    %107 = arith.truncf %106 : vector<8x128xf32> to vector<8x128xbf16>
    %cst_71 = arith.constant dense<0.000000e+00> : vector<8x512xf32>
    %108 = tpu.matmul %107, %6, %cst_71 {dimension_numbers = #tpu.dot_dimension_numbers<[1], [0], [0], [1], [0, 0, 1, 1], [], []>} : vector<8x128xbf16>, vector<128x512xbf16>, vector<8x512xf32> -> vector<8x512xf32>
    %109 = arith.addf %105, %108 : vector<8x512xf32>
    %110 = vector.extract_strided_slice %109 {offsets = [0, 0], sizes = [8, 384], strides = [1, 1]} : vector<8x512xf32> to vector<8x384xf32>
    %111 = arith.negf %110 : vector<8x384xf32>
    %112 = math.exp %111 : vector<8x384xf32>
    %cst_72 = arith.constant 1.000000e+00 : f32
    %113 = vector.broadcast %cst_72 : f32 to vector<8x384xf32>
    %114 = arith.addf %113, %112 : vector<8x384xf32>
    %115 = arith.divf %113, %114 : vector<8x384xf32>
    %116 = vector.extract_strided_slice %109 {offsets = [0, 384], sizes = [8, 128], strides = [1, 1]} : vector<8x512xf32> to vector<8x128xf32>
    %117 = math.tanh %116 : vector<8x128xf32>
    %118 = vector.extract_strided_slice %115 {offsets = [0, 0], sizes = [8, 128], strides = [1, 1]} : vector<8x384xf32> to vector<8x128xf32>
    %119 = vector.extract_strided_slice %115 {offsets = [0, 128], sizes = [8, 128], strides = [1, 1]} : vector<8x384xf32> to vector<8x128xf32>
    %120 = vector.extract_strided_slice %115 {offsets = [0, 256], sizes = [8, 128], strides = [1, 1]} : vector<8x384xf32> to vector<8x128xf32>
    %c0_73 = arith.constant 0 : index
    %c0_74 = arith.constant 0 : index
    %121 = vector.load %arg11[%c0_73, %c0_74] : memref<8x128xf32, #tpu.memory_space<vmem>>, vector<8x128xf32>
    %122 = arith.mulf %119, %121 : vector<8x128xf32>
    %123 = arith.mulf %118, %117 : vector<8x128xf32>
    %124 = arith.addf %122, %123 : vector<8x128xf32>
    %125 = math.tanh %124 : vector<8x128xf32>
    %126 = arith.mulf %120, %125 : vector<8x128xf32>
    %c0_75 = arith.constant 0 : index
    %c0_76 = arith.constant 0 : index
    %127 = vector.load %arg11[%c0_75, %c0_76] : memref<8x128xf32, #tpu.memory_space<vmem>>, vector<8x128xf32>
    tpu.vector_store %arg11[%c0_75, %c0_76], %124 {strides = array<i32>} : memref<8x128xf32, #tpu.memory_space<vmem>>, vector<8x128xf32>,
    %c0_77 = arith.constant 0 : index
    %c0_78 = arith.constant 0 : index
    %128 = vector.load %arg10[%c0_77, %c0_78] : memref<8x128xf32, #tpu.memory_space<vmem>>, vector<8x128xf32>
    tpu.vector_store %arg10[%c0_77, %c0_78], %126 {strides = array<i32>} : memref<8x128xf32, #tpu.memory_space<vmem>>, vector<8x128xf32>,
    %c3_79 = arith.constant 3 : index
    %c0_80 = arith.constant 0 : index
    %c0_81 = arith.constant 0 : index
    %129 = vector.load %arg8[%c3_79, %c0_80, %c0_81] : memref<8x8x128xf32, #tpu.memory_space<vmem>>, vector<1x8x128xf32>
    %130 = vector.shape_cast %129 : vector<1x8x128xf32> to vector<8x128xf32>
    %131 = vector.shape_cast %126 : vector<8x128xf32> to vector<1x8x128xf32>
    tpu.vector_store %arg8[%c3_79, %c0_80, %c0_81], %131 {strides = array<i32>} : memref<8x8x128xf32, #tpu.memory_space<vmem>>, vector<1x8x128xf32>,
    %c4 = arith.constant 4 : index
    %c0_82 = arith.constant 0 : index
    %c0_83 = arith.constant 0 : index
    %132 = vector.load %arg9[%c4, %c0_82, %c0_83] : memref<8x8x512xf32, #tpu.memory_space<vmem>>, vector<1x8x512xf32>
    %133 = vector.shape_cast %132 : vector<1x8x512xf32> to vector<8x512xf32>
    %c0_84 = arith.constant 0 : index
    %c0_85 = arith.constant 0 : index
    %134 = vector.load %arg10[%c0_84, %c0_85] : memref<8x128xf32, #tpu.memory_space<vmem>>, vector<8x128xf32>
    %135 = arith.truncf %134 : vector<8x128xf32> to vector<8x128xbf16>
    %cst_86 = arith.constant dense<0.000000e+00> : vector<8x512xf32>
    %136 = tpu.matmul %135, %6, %cst_86 {dimension_numbers = #tpu.dot_dimension_numbers<[1], [0], [0], [1], [0, 0, 1, 1], [], []>} : vector<8x128xbf16>, vector<128x512xbf16>, vector<8x512xf32> -> vector<8x512xf32>
    %137 = arith.addf %133, %136 : vector<8x512xf32>
    %138 = vector.extract_strided_slice %137 {offsets = [0, 0], sizes = [8, 384], strides = [1, 1]} : vector<8x512xf32> to vector<8x384xf32>
    %139 = arith.negf %138 : vector<8x384xf32>
    %140 = math.exp %139 : vector<8x384xf32>
    %cst_87 = arith.constant 1.000000e+00 : f32
    %141 = vector.broadcast %cst_87 : f32 to vector<8x384xf32>
    %142 = arith.addf %141, %140 : vector<8x384xf32>
    %143 = arith.divf %141, %142 : vector<8x384xf32>
    %144 = vector.extract_strided_slice %137 {offsets = [0, 384], sizes = [8, 128], strides = [1, 1]} : vector<8x512xf32> to vector<8x128xf32>
    %145 = math.tanh %144 : vector<8x128xf32>
    %146 = vector.extract_strided_slice %143 {offsets = [0, 0], sizes = [8, 128], strides = [1, 1]} : vector<8x384xf32> to vector<8x128xf32>
    %147 = vector.extract_strided_slice %143 {offsets = [0, 128], sizes = [8, 128], strides = [1, 1]} : vector<8x384xf32> to vector<8x128xf32>
    %148 = vector.extract_strided_slice %143 {offsets = [0, 256], sizes = [8, 128], strides = [1, 1]} : vector<8x384xf32> to vector<8x128xf32>
    %c0_88 = arith.constant 0 : index
    %c0_89 = arith.constant 0 : index
    %149 = vector.load %arg11[%c0_88, %c0_89] : memref<8x128xf32, #tpu.memory_space<vmem>>, vector<8x128xf32>
    %150 = arith.mulf %147, %149 : vector<8x128xf32>
    %151 = arith.mulf %146, %145 : vector<8x128xf32>
    %152 = arith.addf %150, %151 : vector<8x128xf32>
    %153 = math.tanh %152 : vector<8x128xf32>
    %154 = arith.mulf %148, %153 : vector<8x128xf32>
    %c0_90 = arith.constant 0 : index
    %c0_91 = arith.constant 0 : index
    %155 = vector.load %arg11[%c0_90, %c0_91] : memref<8x128xf32, #tpu.memory_space<vmem>>, vector<8x128xf32>
    tpu.vector_store %arg11[%c0_90, %c0_91], %152 {strides = array<i32>} : memref<8x128xf32, #tpu.memory_space<vmem>>, vector<8x128xf32>,
    %c0_92 = arith.constant 0 : index
    %c0_93 = arith.constant 0 : index
    %156 = vector.load %arg10[%c0_92, %c0_93] : memref<8x128xf32, #tpu.memory_space<vmem>>, vector<8x128xf32>
    tpu.vector_store %arg10[%c0_92, %c0_93], %154 {strides = array<i32>} : memref<8x128xf32, #tpu.memory_space<vmem>>, vector<8x128xf32>,
    %c4_94 = arith.constant 4 : index
    %c0_95 = arith.constant 0 : index
    %c0_96 = arith.constant 0 : index
    %157 = vector.load %arg8[%c4_94, %c0_95, %c0_96] : memref<8x8x128xf32, #tpu.memory_space<vmem>>, vector<1x8x128xf32>
    %158 = vector.shape_cast %157 : vector<1x8x128xf32> to vector<8x128xf32>
    %159 = vector.shape_cast %154 : vector<8x128xf32> to vector<1x8x128xf32>
    tpu.vector_store %arg8[%c4_94, %c0_95, %c0_96], %159 {strides = array<i32>} : memref<8x8x128xf32, #tpu.memory_space<vmem>>, vector<1x8x128xf32>,
    %c5 = arith.constant 5 : index
    %c0_97 = arith.constant 0 : index
    %c0_98 = arith.constant 0 : index
    %160 = vector.load %arg9[%c5, %c0_97, %c0_98] : memref<8x8x512xf32, #tpu.memory_space<vmem>>, vector<1x8x512xf32>
    %161 = vector.shape_cast %160 : vector<1x8x512xf32> to vector<8x512xf32>
    %c0_99 = arith.constant 0 : index
    %c0_100 = arith.constant 0 : index
    %162 = vector.load %arg10[%c0_99, %c0_100] : memref<8x128xf32, #tpu.memory_space<vmem>>, vector<8x128xf32>
    %163 = arith.truncf %162 : vector<8x128xf32> to vector<8x128xbf16>
    %cst_101 = arith.constant dense<0.000000e+00> : vector<8x512xf32>
    %164 = tpu.matmul %163, %6, %cst_101 {dimension_numbers = #tpu.dot_dimension_numbers<[1], [0], [0], [1], [0, 0, 1, 1], [], []>} : vector<8x128xbf16>, vector<128x512xbf16>, vector<8x512xf32> -> vector<8x512xf32>
    %165 = arith.addf %161, %164 : vector<8x512xf32>
    %166 = vector.extract_strided_slice %165 {offsets = [0, 0], sizes = [8, 384], strides = [1, 1]} : vector<8x512xf32> to vector<8x384xf32>
    %167 = arith.negf %166 : vector<8x384xf32>
    %168 = math.exp %167 : vector<8x384xf32>
    %cst_102 = arith.constant 1.000000e+00 : f32
    %169 = vector.broadcast %cst_102 : f32 to vector<8x384xf32>
    %170 = arith.addf %169, %168 : vector<8x384xf32>
    %171 = arith.divf %169, %170 : vector<8x384xf32>
    %172 = vector.extract_strided_slice %165 {offsets = [0, 384], sizes = [8, 128], strides = [1, 1]} : vector<8x512xf32> to vector<8x128xf32>
    %173 = math.tanh %172 : vector<8x128xf32>
    %174 = vector.extract_strided_slice %171 {offsets = [0, 0], sizes = [8, 128], strides = [1, 1]} : vector<8x384xf32> to vector<8x128xf32>
    %175 = vector.extract_strided_slice %171 {offsets = [0, 128], sizes = [8, 128], strides = [1, 1]} : vector<8x384xf32> to vector<8x128xf32>
    %176 = vector.extract_strided_slice %171 {offsets = [0, 256], sizes = [8, 128], strides = [1, 1]} : vector<8x384xf32> to vector<8x128xf32>
    %c0_103 = arith.constant 0 : index
    %c0_104 = arith.constant 0 : index
    %177 = vector.load %arg11[%c0_103, %c0_104] : memref<8x128xf32, #tpu.memory_space<vmem>>, vector<8x128xf32>
    %178 = arith.mulf %175, %177 : vector<8x128xf32>
    %179 = arith.mulf %174, %173 : vector<8x128xf32>
    %180 = arith.addf %178, %179 : vector<8x128xf32>
    %181 = math.tanh %180 : vector<8x128xf32>
    %182 = arith.mulf %176, %181 : vector<8x128xf32>
    %c0_105 = arith.constant 0 : index
    %c0_106 = arith.constant 0 : index
    %183 = vector.load %arg11[%c0_105, %c0_106] : memref<8x128xf32, #tpu.memory_space<vmem>>, vector<8x128xf32>
    tpu.vector_store %arg11[%c0_105, %c0_106], %180 {strides = array<i32>} : memref<8x128xf32, #tpu.memory_space<vmem>>, vector<8x128xf32>,
    %c0_107 = arith.constant 0 : index
    %c0_108 = arith.constant 0 : index
    %184 = vector.load %arg10[%c0_107, %c0_108] : memref<8x128xf32, #tpu.memory_space<vmem>>, vector<8x128xf32>
    tpu.vector_store %arg10[%c0_107, %c0_108], %182 {strides = array<i32>} : memref<8x128xf32, #tpu.memory_space<vmem>>, vector<8x128xf32>,
    %c5_109 = arith.constant 5 : index
    %c0_110 = arith.constant 0 : index
    %c0_111 = arith.constant 0 : index
    %185 = vector.load %arg8[%c5_109, %c0_110, %c0_111] : memref<8x8x128xf32, #tpu.memory_space<vmem>>, vector<1x8x128xf32>
    %186 = vector.shape_cast %185 : vector<1x8x128xf32> to vector<8x128xf32>
    %187 = vector.shape_cast %182 : vector<8x128xf32> to vector<1x8x128xf32>
    tpu.vector_store %arg8[%c5_109, %c0_110, %c0_111], %187 {strides = array<i32>} : memref<8x8x128xf32, #tpu.memory_space<vmem>>, vector<1x8x128xf32>,
    %c6 = arith.constant 6 : index
    %c0_112 = arith.constant 0 : index
    %c0_113 = arith.constant 0 : index
    %188 = vector.load %arg9[%c6, %c0_112, %c0_113] : memref<8x8x512xf32, #tpu.memory_space<vmem>>, vector<1x8x512xf32>
    %189 = vector.shape_cast %188 : vector<1x8x512xf32> to vector<8x512xf32>
    %c0_114 = arith.constant 0 : index
    %c0_115 = arith.constant 0 : index
    %190 = vector.load %arg10[%c0_114, %c0_115] : memref<8x128xf32, #tpu.memory_space<vmem>>, vector<8x128xf32>
    %191 = arith.truncf %190 : vector<8x128xf32> to vector<8x128xbf16>
    %cst_116 = arith.constant dense<0.000000e+00> : vector<8x512xf32>
    %192 = tpu.matmul %191, %6, %cst_116 {dimension_numbers = #tpu.dot_dimension_numbers<[1], [0], [0], [1], [0, 0, 1, 1], [], []>} : vector<8x128xbf16>, vector<128x512xbf16>, vector<8x512xf32> -> vector<8x512xf32>
    %193 = arith.addf %189, %192 : vector<8x512xf32>
    %194 = vector.extract_strided_slice %193 {offsets = [0, 0], sizes = [8, 384], strides = [1, 1]} : vector<8x512xf32> to vector<8x384xf32>
    %195 = arith.negf %194 : vector<8x384xf32>
    %196 = math.exp %195 : vector<8x384xf32>
    %cst_117 = arith.constant 1.000000e+00 : f32
    %197 = vector.broadcast %cst_117 : f32 to vector<8x384xf32>
    %198 = arith.addf %197, %196 : vector<8x384xf32>
    %199 = arith.divf %197, %198 : vector<8x384xf32>
    %200 = vector.extract_strided_slice %193 {offsets = [0, 384], sizes = [8, 128], strides = [1, 1]} : vector<8x512xf32> to vector<8x128xf32>
    %201 = math.tanh %200 : vector<8x128xf32>
    %202 = vector.extract_strided_slice %199 {offsets = [0, 0], sizes = [8, 128], strides = [1, 1]} : vector<8x384xf32> to vector<8x128xf32>
    %203 = vector.extract_strided_slice %199 {offsets = [0, 128], sizes = [8, 128], strides = [1, 1]} : vector<8x384xf32> to vector<8x128xf32>
    %204 = vector.extract_strided_slice %199 {offsets = [0, 256], sizes = [8, 128], strides = [1, 1]} : vector<8x384xf32> to vector<8x128xf32>
    %c0_118 = arith.constant 0 : index
    %c0_119 = arith.constant 0 : index
    %205 = vector.load %arg11[%c0_118, %c0_119] : memref<8x128xf32, #tpu.memory_space<vmem>>, vector<8x128xf32>
    %206 = arith.mulf %203, %205 : vector<8x128xf32>
    %207 = arith.mulf %202, %201 : vector<8x128xf32>
    %208 = arith.addf %206, %207 : vector<8x128xf32>
    %209 = math.tanh %208 : vector<8x128xf32>
    %210 = arith.mulf %204, %209 : vector<8x128xf32>
    %c0_120 = arith.constant 0 : index
    %c0_121 = arith.constant 0 : index
    %211 = vector.load %arg11[%c0_120, %c0_121] : memref<8x128xf32, #tpu.memory_space<vmem>>, vector<8x128xf32>
    tpu.vector_store %arg11[%c0_120, %c0_121], %208 {strides = array<i32>} : memref<8x128xf32, #tpu.memory_space<vmem>>, vector<8x128xf32>,
    %c0_122 = arith.constant 0 : index
    %c0_123 = arith.constant 0 : index
    %212 = vector.load %arg10[%c0_122, %c0_123] : memref<8x128xf32, #tpu.memory_space<vmem>>, vector<8x128xf32>
    tpu.vector_store %arg10[%c0_122, %c0_123], %210 {strides = array<i32>} : memref<8x128xf32, #tpu.memory_space<vmem>>, vector<8x128xf32>,
    %c6_124 = arith.constant 6 : index
    %c0_125 = arith.constant 0 : index
    %c0_126 = arith.constant 0 : index
    %213 = vector.load %arg8[%c6_124, %c0_125, %c0_126] : memref<8x8x128xf32, #tpu.memory_space<vmem>>, vector<1x8x128xf32>
    %214 = vector.shape_cast %213 : vector<1x8x128xf32> to vector<8x128xf32>
    %215 = vector.shape_cast %210 : vector<8x128xf32> to vector<1x8x128xf32>
    tpu.vector_store %arg8[%c6_124, %c0_125, %c0_126], %215 {strides = array<i32>} : memref<8x8x128xf32, #tpu.memory_space<vmem>>, vector<1x8x128xf32>,
    %c7 = arith.constant 7 : index
    %c0_127 = arith.constant 0 : index
    %c0_128 = arith.constant 0 : index
    %216 = vector.load %arg9[%c7, %c0_127, %c0_128] : memref<8x8x512xf32, #tpu.memory_space<vmem>>, vector<1x8x512xf32>
    %217 = vector.shape_cast %216 : vector<1x8x512xf32> to vector<8x512xf32>
    %c0_129 = arith.constant 0 : index
    %c0_130 = arith.constant 0 : index
    %218 = vector.load %arg10[%c0_129, %c0_130] : memref<8x128xf32, #tpu.memory_space<vmem>>, vector<8x128xf32>
    %219 = arith.truncf %218 : vector<8x128xf32> to vector<8x128xbf16>
    %cst_131 = arith.constant dense<0.000000e+00> : vector<8x512xf32>
    %220 = tpu.matmul %219, %6, %cst_131 {dimension_numbers = #tpu.dot_dimension_numbers<[1], [0], [0], [1], [0, 0, 1, 1], [], []>} : vector<8x128xbf16>, vector<128x512xbf16>, vector<8x512xf32> -> vector<8x512xf32>
    %221 = arith.addf %217, %220 : vector<8x512xf32>
    %222 = vector.extract_strided_slice %221 {offsets = [0, 0], sizes = [8, 384], strides = [1, 1]} : vector<8x512xf32> to vector<8x384xf32>
    %223 = arith.negf %222 : vector<8x384xf32>
    %224 = math.exp %223 : vector<8x384xf32>
    %cst_132 = arith.constant 1.000000e+00 : f32
    %225 = vector.broadcast %cst_132 : f32 to vector<8x384xf32>
    %226 = arith.addf %225, %224 : vector<8x384xf32>
    %227 = arith.divf %225, %226 : vector<8x384xf32>
    %228 = vector.extract_strided_slice %221 {offsets = [0, 384], sizes = [8, 128], strides = [1, 1]} : vector<8x512xf32> to vector<8x128xf32>
    %229 = math.tanh %228 : vector<8x128xf32>
    %230 = vector.extract_strided_slice %227 {offsets = [0, 0], sizes = [8, 128], strides = [1, 1]} : vector<8x384xf32> to vector<8x128xf32>
    %231 = vector.extract_strided_slice %227 {offsets = [0, 128], sizes = [8, 128], strides = [1, 1]} : vector<8x384xf32> to vector<8x128xf32>
    %232 = vector.extract_strided_slice %227 {offsets = [0, 256], sizes = [8, 128], strides = [1, 1]} : vector<8x384xf32> to vector<8x128xf32>
    %c0_133 = arith.constant 0 : index
    %c0_134 = arith.constant 0 : index
    %233 = vector.load %arg11[%c0_133, %c0_134] : memref<8x128xf32, #tpu.memory_space<vmem>>, vector<8x128xf32>
    %234 = arith.mulf %231, %233 : vector<8x128xf32>
    %235 = arith.mulf %230, %229 : vector<8x128xf32>
    %236 = arith.addf %234, %235 : vector<8x128xf32>
    %237 = math.tanh %236 : vector<8x128xf32>
    %238 = arith.mulf %232, %237 : vector<8x128xf32>
    %c0_135 = arith.constant 0 : index
    %c0_136 = arith.constant 0 : index
    %239 = vector.load %arg11[%c0_135, %c0_136] : memref<8x128xf32, #tpu.memory_space<vmem>>, vector<8x128xf32>
    tpu.vector_store %arg11[%c0_135, %c0_136], %236 {strides = array<i32>} : memref<8x128xf32, #tpu.memory_space<vmem>>, vector<8x128xf32>,
    %c0_137 = arith.constant 0 : index
    %c0_138 = arith.constant 0 : index
    %240 = vector.load %arg10[%c0_137, %c0_138] : memref<8x128xf32, #tpu.memory_space<vmem>>, vector<8x128xf32>
    tpu.vector_store %arg10[%c0_137, %c0_138], %238 {strides = array<i32>} : memref<8x128xf32, #tpu.memory_space<vmem>>, vector<8x128xf32>,
    %c7_139 = arith.constant 7 : index
    %c0_140 = arith.constant 0 : index
    %c0_141 = arith.constant 0 : index
    %241 = vector.load %arg8[%c7_139, %c0_140, %c0_141] : memref<8x8x128xf32, #tpu.memory_space<vmem>>, vector<1x8x128xf32>
    %242 = vector.shape_cast %241 : vector<1x8x128xf32> to vector<8x128xf32>
    %243 = vector.shape_cast %238 : vector<8x128xf32> to vector<1x8x128xf32>
    tpu.vector_store %arg8[%c7_139, %c0_140, %c0_141], %243 {strides = array<i32>} : memref<8x8x128xf32, #tpu.memory_space<vmem>>, vector<1x8x128xf32>,
    %c2_i32 = arith.constant 2 : i32
    %244 = arith.cmpi eq, %arg0, %c2_i32 : i32
    %245 = arith.extui %244 : i1 to i32
    %c0_i32_142 = arith.constant 0 : i32
    %246 = arith.cmpi ne, %245, %c0_i32_142 : i32
    scf.if %246 {
      %c0_143 = arith.constant 0 : index
      %c0_144 = arith.constant 0 : index
      %c0_145 = arith.constant 0 : index
      %247 = vector.load %arg8[%c0_143, %c0_144, %c0_145] : memref<8x8x128xf32, #tpu.memory_space<vmem>>, vector<8x8x128xf32>
      %248 = arith.truncf %247 : vector<8x8x128xf32> to vector<8x8x128xbf16>
      %c0_146 = arith.constant 0 : index
      %c0_147 = arith.constant 0 : index
      %249 = vector.load %arg5[%c0_146, %c0_147] : memref<128x128xbf16, #tpu.memory_space<vmem>>, vector<128x128xbf16>
      "tpu.trace_start"() <{level = 10 : i32, message = "tbh,hd->tbd"}> : () -> ()
      %cst_148 = arith.constant dense<0.000000e+00> : vector<8x8x128xf32>
      %250 = tpu.matmul %248, %249, %cst_148 {dimension_numbers = #tpu.dot_dimension_numbers<[2], [0], [0, 1], [1], [0, 0, 0, 1, 1, 1], [], []>} : vector<8x8x128xbf16>, vector<128x128xbf16>, vector<8x8x128xf32> -> vector<8x8x128xf32>
      "tpu.trace_stop"() : () -> ()
      %c0_149 = arith.constant 0 : index
      %c0_150 = arith.constant 0 : index
      %251 = vector.load %arg6[%c0_149, %c0_150] : memref<1x128xf32, #tpu.memory_space<vmem>>, vector<1x128xf32>
      %252 = vector.shape_cast %251 : vector<1x128xf32> to vector<1x1x128xf32>
      %253 = vector.broadcast %252 : vector<1x1x128xf32> to vector<8x8x128xf32>
      %254 = arith.addf %250, %253 : vector<8x8x128xf32>
      %c0_151 = arith.constant 0 : index
      %c0_152 = arith.constant 0 : index
      %c0_153 = arith.constant 0 : index
      %255 = vector.load %arg7[%c0_151, %c0_152, %c0_153] : memref<8x8x128xf32, #tpu.memory_space<vmem>>, vector<8x8x128xf32>
      tpu.vector_store %arg7[%c0_151, %c0_152, %c0_153], %254 {strides = array<i32>} : memref<8x8x128xf32, #tpu.memory_space<vmem>>, vector<8x8x128xf32>,
    } else {
    }
    return
  }
  func.func @transform_0(%arg0: i32) -> (i32, i32, i32) {
    %c0_i32 = arith.constant 0 : i32
    %c0_i32_0 = arith.constant 0 : i32
    %c0_i32_1 = arith.constant 0 : i32
    %c0_i32_2 = arith.constant 0 : i32
    return %c0_i32, %c0_i32_0, %c0_i32_1 : i32, i32, i32
  }
  func.func @transform_1(%arg0: i32) -> (i32, i32, i32) {
    %c0_i32 = arith.constant 0 : i32
    %c0_i32_0 = arith.constant 0 : i32
    %c0_i32_1 = arith.constant 0 : i32
    return %arg0, %c0_i32, %c0_i32_0 : i32, i32, i32
  }
  func.func @transform_2(%arg0: i32) -> (i32, i32, i32) {
    %c0_i32 = arith.constant 0 : i32
    %c0_i32_0 = arith.constant 0 : i32
    %c0_i32_1 = arith.constant 0 : i32
    return %arg0, %c0_i32, %c0_i32_0 : i32, i32, i32
  }
  func.func @transform_3(%arg0: i32) -> (i32, i32, i32) {
    %c0_i32 = arith.constant 0 : i32
    %c0_i32_0 = arith.constant 0 : i32
    %c0_i32_1 = arith.constant 0 : i32
    return %arg0, %c0_i32, %c0_i32_0 : i32, i32, i32
  }
  func.func @transform_4(%arg0: i32) -> (i32, i32) {
    %c0_i32 = arith.constant 0 : i32
    %c0_i32_0 = arith.constant 0 : i32
    %c0_i32_1 = arith.constant 0 : i32
    return %c0_i32, %c0_i32_0 : i32, i32
  }
  func.func @transform_5(%arg0: i32) -> (i32, i32) {
    %c0_i32 = arith.constant 0 : i32
    %c0_i32_0 = arith.constant 0 : i32
    %c0_i32_1 = arith.constant 0 : i32
    return %c0_i32, %c0_i32_0 : i32, i32
  }
  func.func @transform_6(%arg0: i32) -> (i32, i32, i32) {
    %c0_i32 = arith.constant 0 : i32
    %c0_i32_0 = arith.constant 0 : i32
    %c0_i32_1 = arith.constant 0 : i32
    %c0_i32_2 = arith.constant 0 : i32
    return %c0_i32, %c0_i32_0, %c0_i32_1 : i32, i32, i32
  }
}

</mosaic_0001>

<llo_original>
// kernel: lstm_model_forward.1
$region0: #{lstm_model_forward.1}
  #allocation0 [shape = 'u32[]', space=smem, size = 0x4, offset = 0x4, fixed_abs, tag = 'smem constant byte address 0x4 - core index']
  #allocation1 [shape = 'u32[72,128]{1,0:T(1,128)}', space=vmem, size = 0x9000, scoped, tag = 'internal scratch']
  #allocation2 [shape = 'f32[8,8,128]{2,1,0:T(8,128)}', space=vmem, size = 0x8000, scoped, tag = 'scratch operand']
  #allocation3 [shape = 'f32[8,8,512]{2,1,0:T(8,128)}', space=vmem, size = 0x20000, scoped, tag = 'scratch operand']
  #allocation4 [shape = 'f32[8,128]{1,0:T(8,128)}', space=vmem, size = 0x1000, scoped, tag = 'scratch operand']
  #allocation5 [shape = 'f32[8,128]{1,0:T(8,128)}', space=vmem, size = 0x1000, scoped, tag = 'scratch operand']
  %s0 = inlined_call_operand.vmem [shape: f32[8,8,128], index: 0, kind: input, shape index: {}]
  %s1 = inlined_call_operand.hbm [shape: bf16[3,128,512], index: 1, kind: input, shape index: {}]
  %s2 = inlined_call_operand.hbm [shape: bf16[3,128,512], index: 2, kind: input, shape index: {}]
  %s3 = inlined_call_operand.vmem [shape: f32[3,1,512], index: 3, kind: input, shape index: {}]
  %s4 = inlined_call_operand.vmem [shape: bf16[128,128], index: 4, kind: input, shape index: {}]
  %s5 = inlined_call_operand.vmem [shape: f32[1,128], index: 5, kind: input, shape index: {}]
  %s6 = inlined_call_operand.vmem [shape: f32[8,8,128], index: 6, kind: output, shape index: {}]
  %s7 = sld [smem:[#allocation0]]
  $region73: #{lstm_model_forward.1} parent=0
    _
  %s9 = ssub.s32 1, %s7
  %s10 = scalar_select 0, %s9, %s7
  $region1: #{lstm_model_forward.1} parent=0
    #allocation6 [shape = 'u8[262144]{0}', space=vmem, size = 0x40000, scoped, tag = 'input window, operand 1']
    #allocation7 [shape = 's32[2]{0}', space=sflag, size = 0x8, scoped, tag = 'scoped memory for lstm_model_forward.1']
    #allocation8 [shape = 'u8[262144]{0}', space=vmem, size = 0x40000, scoped, tag = 'input window, operand 2']
    #allocation9 [shape = 's32[2]{0}', space=sflag, size = 0x8, scoped, tag = 'scoped memory for lstm_model_forward.1']
    %11 = vsyncpa [#allocation7], 0
    %s12 = scalar_lea.sflag [#allocation7], 1
    %13 = vsyncpa %s12, 0
    %14 = vsyncpa [#allocation9], 0
    %s15 = scalar_lea.sflag [#allocation9], 1
    %16 = vsyncpa %s15, 0
    loop: start=0, step=1, limit=5
    $region2: #{lstm_model_forward.1} parent=1 // loop_pre_header
      _
    $region3: #{lstm_model_forward.1} parent=1 // loop_header
      %s18 = sphi 0, %s22
      %p19 = scmp.ge.s32.totalorder %s18, 5
      %s26 = sphi 0, %s26
      %s28 = sphi 0, %s26
      %s29 = sphi 0, %s28
      %s43 = sphi 0, %s29
      %s49 = sphi 0, %s51
      %s52 = sphi 0, %s49
      %s53 = sphi 0, %s52
      %s69 = sphi 0, %s53
      %s75 = sphi 0, %s77
      %s78 = sphi 0, %s75
      %s79 = sphi 0, %s78
      %s95 = sphi 0, %s79
      %s101 = sphi 0, %s103
      %s104 = sphi 0, %s101
      %s105 = sphi 0, %s104
      %s121 = sphi 0, %s105
      %s125 = sphi 0, %s125
      %s127 = sphi 0, %s125
      %s128 = sphi 0, %s127
      %s142 = sphi 0, %s128
      %s146 = sphi 0, %s146
      %s148 = sphi 0, %s146
      %s149 = sphi 0, %s148
      %s163 = sphi 0, %s149
      %s167 = sphi 0, %s167
      %s169 = sphi 0, %s167
      %s170 = sphi 0, %s169
      %s184 = sphi 0, %s170
    $region4: #{lstm_model_forward.1} parent=1 // loop_header_branch
      %21 = sbr.rel (%p19) target = $region8
    $region5: #{lstm_model_forward.1} parent=1 // loop_body
      %s23 = ssub.s32 %s18, 1
      %s24 = ssub.s32 %s18, 2
      %s25 = sadd.s32 %s18, 1
      %s27 = sadd.s32 %s26, 1
      %p30 = scmp.eq.s32.totalorder %s18, 2
      %p31 = scmp.ne.s32.totalorder %s26, %s28
      %p32 = scmp.eq.s32.totalorder %s18, 0
      %p33 = por %p31, %p32
      %p34 = scmp.ne.s32.totalorder %s26, %s28
      %p35 = scmp.eq.s32.totalorder %s23, 2
      %p36 = por %p34, %p35
      %p37 = scmp.ne.s32.totalorder %s28, %s29
      %p38 = scmp.eq.s32.totalorder %s23, 0
      %p39 = por %p37, %p38
      %p40 = scmp.ne.s32.totalorder %s28, %s29
      %p41 = scmp.eq.s32.totalorder %s24, 2
      %p42 = por %p40, %p41
      %p44 = scmp.ne.s32.totalorder %s29, %s43
      %p45 = scmp.eq.s32.totalorder %s24, 0
      %p46 = por %p44, %p45
      %s47 = ssub.s32 %s18, %s25
      %p48 = scmp.eq.s32.totalorder %s47, 0
      %s50 = sadd.s32 %s49, 1
      %s51 = scalar_select %p48, %s49, %s50
      %p54 = pneg %p48
      %p55 = scmp.eq.s32.totalorder %s18, 2
      %p56 = por %p54, %p55
      %p57 = scmp.ne.s32.totalorder %s49, %s52
      %p58 = scmp.eq.s32.totalorder %s18, 0
      %p59 = por %p57, %p58
      %p60 = scmp.ne.s32.totalorder %s49, %s52
      %p61 = scmp.eq.s32.totalorder %s23, 2
      %p62 = por %p60, %p61
      %p63 = scmp.ne.s32.totalorder %s52, %s53
      %p64 = scmp.eq.s32.totalorder %s23, 0
      %p65 = por %p63, %p64
      %p66 = scmp.ne.s32.totalorder %s52, %s53
      %p67 = scmp.eq.s32.totalorder %s24, 2
      %p68 = por %p66, %p67
      %p70 = scmp.ne.s32.totalorder %s53, %s69
      %p71 = scmp.eq.s32.totalorder %s24, 0
      %p72 = por %p70, %p71
      %s73 = ssub.s32 %s18, %s25
      %p74 = scmp.eq.s32.totalorder %s73, 0
      %s76 = sadd.s32 %s75, 1
      %s77 = scalar_select %p74, %s75, %s76
      %p80 = pneg %p74
      %p81 = scmp.eq.s32.totalorder %s18, 2
      %p82 = por %p80, %p81
      %p83 = scmp.ne.s32.totalorder %s75, %s78
      %p84 = scmp.eq.s32.totalorder %s18, 0
      %p85 = por %p83, %p84
      %p86 = scmp.ne.s32.totalorder %s75, %s78
      %p87 = scmp.eq.s32.totalorder %s23, 2
      %p88 = por %p86, %p87
      %p89 = scmp.ne.s32.totalorder %s78, %s79
      %p90 = scmp.eq.s32.totalorder %s23, 0
      %p91 = por %p89, %p90
      %p92 = scmp.ne.s32.totalorder %s78, %s79
      %p93 = scmp.eq.s32.totalorder %s24, 2
      %p94 = por %p92, %p93
      %p96 = scmp.ne.s32.totalorder %s79, %s95
      %p97 = scmp.eq.s32.totalorder %s24, 0
      %p98 = por %p96, %p97
      %s99 = ssub.s32 %s18, %s25
      %p100 = scmp.eq.s32.totalorder %s99, 0
      %s102 = sadd.s32 %s101, 1
      %s103 = scalar_select %p100, %s101, %s102
      %p106 = pneg %p100
      %p107 = scmp.eq.s32.totalorder %s18, 2
      %p108 = por %p106, %p107
      %p109 = scmp.ne.s32.totalorder %s101, %s104
      %p110 = scmp.eq.s32.totalorder %s18, 0
      %p111 = por %p109, %p110
      %p112 = scmp.ne.s32.totalorder %s101, %s104
      %p113 = scmp.eq.s32.totalorder %s23, 2
      %p114 = por %p112, %p113
      %p115 = scmp.ne.s32.totalorder %s104, %s105
      %p116 = scmp.eq.s32.totalorder %s23, 0
      %p117 = por %p115, %p116
      %p118 = scmp.ne.s32.totalorder %s104, %s105
      %p119 = scmp.eq.s32.totalorder %s24, 2
      %p120 = por %p118, %p119
      %p122 = scmp.ne.s32.totalorder %s105, %s121
      %p123 = scmp.eq.s32.totalorder %s24, 0
      %p124 = por %p122, %p123
      %s126 = sadd.s32 %s125, 1
      %p129 = scmp.eq.s32.totalorder %s18, 2
      %p130 = scmp.ne.s32.totalorder %s125, %s127
      %p131 = scmp.eq.s32.totalorder %s18, 0
      %p132 = por %p130, %p131
      %p133 = scmp.ne.s32.totalorder %s125, %s127
      %p134 = scmp.eq.s32.totalorder %s23, 2
      %p135 = por %p133, %p134
      %p136 = scmp.ne.s32.totalorder %s127, %s128
      %p137 = scmp.eq.s32.totalorder %s23, 0
      %p138 = por %p136, %p137
      %p139 = scmp.ne.s32.totalorder %s127, %s128
      %p140 = scmp.eq.s32.totalorder %s24, 2
      %p141 = por %p139, %p140
      %p143 = scmp.ne.s32.totalorder %s128, %s142
      %p144 = scmp.eq.s32.totalorder %s24, 0
      %p145 = por %p143, %p144
      %s147 = sadd.s32 %s146, 1
      %p150 = scmp.eq.s32.totalorder %s18, 2
      %p151 = scmp.ne.s32.totalorder %s146, %s148
      %p152 = scmp.eq.s32.totalorder %s18, 0
      %p153 = por %p151, %p152
      %p154 = scmp.ne.s32.totalorder %s146, %s148
      %p155 = scmp.eq.s32.totalorder %s23, 2
      %p156 = por %p154, %p155
      %p157 = scmp.ne.s32.totalorder %s148, %s149
      %p158 = scmp.eq.s32.totalorder %s23, 0
      %p159 = por %p157, %p158
      %p160 = scmp.ne.s32.totalorder %s148, %s149
      %p161 = scmp.eq.s32.totalorder %s24, 2
      %p162 = por %p160, %p161
      %p164 = scmp.ne.s32.totalorder %s149, %s163
      %p165 = scmp.eq.s32.totalorder %s24, 0
      %p166 = por %p164, %p165
      %s168 = sadd.s32 %s167, 1
      %p171 = scmp.eq.s32.totalorder %s18, 2
      %p172 = scmp.ne.s32.totalorder %s167, %s169
      %p173 = scmp.eq.s32.totalorder %s18, 0
      %p174 = por %p172, %p173
      %p175 = scmp.ne.s32.totalorder %s167, %s169
      %p176 = scmp.eq.s32.totalorder %s23, 2
      %p177 = por %p175, %p176
      %p178 = scmp.ne.s32.totalorder %s169, %s170
      %p179 = scmp.eq.s32.totalorder %s23, 0
      %p180 = por %p178, %p179
      %p181 = scmp.ne.s32.totalorder %s169, %s170
      %p182 = scmp.eq.s32.totalorder %s24, 2
      %p183 = por %p181, %p182
      %p185 = scmp.ne.s32.totalorder %s170, %s184
      %p186 = scmp.eq.s32.totalorder %s24, 0
      %p187 = por %p185, %p186
      %p188 = scmp.le.s32.totalorder 1, %s18
      %p189 = scmp.lt.s32.totalorder %s18, 4
      %p190 = pnand %p188, %p189
      %p191 = pneg %p190
      // Predicated region
      $region9: #{lstm_model_forward.1} parent=5 // pred_check
        _
      $region10: #{lstm_model_forward.1} parent=5 // pred_check_branch
        %193 = sbr.rel (%p190) target = $region12
      $region11: #{lstm_model_forward.1} parent=5 // pred_region
        %s194 = ssub.s32 %s18, 1
        // Predicated region
        $region13: #{lstm_model_forward.1} parent=11 // pred_check
          %p195 = pneg %p39
        $region14: #{lstm_model_forward.1} parent=11 // pred_check_branch
          %197 = sbr.rel (%p195) target = $region16
        $region15: #{lstm_model_forward.1} parent=11 // pred_region
          _
        $region16: #{lstm_model_forward.1} parent=11 // pred_fallthru
          _
        // Predicated region
        $region17: #{lstm_model_forward.1} parent=11 // pred_check
          %p198 = pneg %p138
        $region18: #{lstm_model_forward.1} parent=11 // pred_check_branch
          %200 = sbr.rel (%p198) target = $region20
        $region19: #{lstm_model_forward.1} parent=11 // pred_region
          _
        $region20: #{lstm_model_forward.1} parent=11 // pred_fallthru
          _
        // Predicated region
        $region21: #{lstm_model_forward.1} parent=11 // pred_check
          %p201 = pneg %p159
        $region22: #{lstm_model_forward.1} parent=11 // pred_check_branch
          %203 = sbr.rel (%p201) target = $region24
        $region23: #{lstm_model_forward.1} parent=11 // pred_region
          _
        $region24: #{lstm_model_forward.1} parent=11 // pred_fallthru
          _
      $region12: #{lstm_model_forward.1} parent=5 // pred_fallthru
        _
      %p204 = scmp.lt.s32.totalorder %s18, 3
      // Predicated region
      $region25: #{lstm_model_forward.1} parent=5 // pred_check
        %p205 = pneg %p204
      $region26: #{lstm_model_forward.1} parent=5 // pred_check_branch
        %207 = sbr.rel (%p205) target = $region28
      $region27: #{lstm_model_forward.1} parent=5 // pred_region
        // Predicated region
        $region29: #{lstm_model_forward.1} parent=27 // pred_check
          %p208 = pneg %p59
        $region30: #{lstm_model_forward.1} parent=27 // pred_check_branch
          %210 = sbr.rel (%p208) target = $region32
        $region31: #{lstm_model_forward.1} parent=27 // pred_region
          %s211 = sand.u32 %s49, 1
          %s212 = scalar_lea.sflag [#allocation7], %s211
          %s213 = sand.u32 %s49, 1
          %s214 = smul.addr %s213, 256
          %s215 = scalar_lea.vmem [#allocation6], %s214
          %217 = vsyncadd %s212, 0
          %s218 = smul.addr %s18, 64
          %s219 = smul.addr %s218, 4
          %s220 = scalar_lea.hbm %s1, %s219
          %s221 = sshll.u32 %s220, 4
          %s222 = int_to_ptr.hbm [resolvable:$true] %s221
          %s223 = sshll.u32 %s215, 4
          %s224 = int_to_ptr.vmem [resolvable:$true] %s223
          %229 = dma.hbm_to_vmem [thread:$0]  %s222, 4096, %s224, %s212, 256, 256, 16
        $region32: #{lstm_model_forward.1} parent=27 // pred_fallthru
          _
        // Predicated region
        $region33: #{lstm_model_forward.1} parent=27 // pred_check
          %p230 = pneg %p85
        $region34: #{lstm_model_forward.1} parent=27 // pred_check_branch
          %232 = sbr.rel (%p230) target = $region36
        $region35: #{lstm_model_forward.1} parent=27 // pred_region
          %s233 = sand.u32 %s75, 1
          %s234 = scalar_lea.sflag [#allocation9], %s233
          %s235 = sand.u32 %s75, 1
          %s236 = smul.addr %s235, 256
          %s237 = scalar_lea.vmem [#allocation8], %s236
          %239 = vsyncadd %s234, 0
          %s240 = smul.addr %s18, 64
          %s241 = smul.addr %s240, 4
          %s242 = scalar_lea.hbm %s2, %s241
          %s243 = sshll.u32 %s242, 4
          %s244 = int_to_ptr.hbm [resolvable:$true] %s243
          %s245 = sshll.u32 %s237, 4
          %s246 = int_to_ptr.vmem [resolvable:$true] %s245
          %251 = dma.hbm_to_vmem [thread:$0]  %s244, 4096, %s246, %s234, 256, 256, 16
        $region36: #{lstm_model_forward.1} parent=27 // pred_fallthru
          _
        // Predicated region
        $region37: #{lstm_model_forward.1} parent=27 // pred_check
          %p252 = pneg %p111
        $region38: #{lstm_model_forward.1} parent=27 // pred_check_branch
          %254 = sbr.rel (%p252) target = $region40
        $region39: #{lstm_model_forward.1} parent=27 // pred_region
          %p255 = scmp.lt.s32.totalorder %s18, 2
          %s256 = scalar_select %p255, %s18, 2
          %s257 = smul.addr %s256, 4
          %s258 = scalar_lea.vmem %s3, %s257
        $region40: #{lstm_model_forward.1} parent=27 // pred_fallthru
          _
      $region28: #{lstm_model_forward.1} parent=5 // pred_fallthru
        _
      %p259 = scmp.le.s32.totalorder 1, %s18
      %p260 = scmp.lt.s32.totalorder %s18, 4
      %p261 = pnand %p259, %p260
      %p262 = pneg %p261
      // Predicated region
      $region41: #{lstm_model_forward.1} parent=5 // pred_check
        _
      $region42: #{lstm_model_forward.1} parent=5 // pred_check_branch
        %264 = sbr.rel (%p261) target = $region44
      $region43: #{lstm_model_forward.1} parent=5 // pred_region
        %s265 = ssub.s32 %s18, 1
        %s266 = sand.u32 %s52, 1
        %s267 = scalar_lea.sflag [#allocation7], %s266
        %s268 = sand.u32 %s52, 1
        %s269 = smul.addr %s268, 256
        %s270 = scalar_lea.vmem [#allocation6], %s269
        // Predicated region
        $region45: #{lstm_model_forward.1} parent=43 // pred_check
          %p271 = pneg %p65
        $region46: #{lstm_model_forward.1} parent=43 // pred_check_branch
          %273 = sbr.rel (%p271) target = $region48
        $region47: #{lstm_model_forward.1} parent=43 // pred_region
          %275 = dma.done %s267, 4096
        $region48: #{lstm_model_forward.1} parent=43 // pred_fallthru
          _
        %s276 = sand.u32 %s78, 1
        %s277 = scalar_lea.sflag [#allocation9], %s276
        %s278 = sand.u32 %s78, 1
        %s279 = smul.addr %s278, 256
        %s280 = scalar_lea.vmem [#allocation8], %s279
        // Predicated region
        $region49: #{lstm_model_forward.1} parent=43 // pred_check
          %p281 = pneg %p91
        $region50: #{lstm_model_forward.1} parent=43 // pred_check_branch
          %283 = sbr.rel (%p281) target = $region52
        $region51: #{lstm_model_forward.1} parent=43 // pred_region
          %285 = dma.done %s277, 4096
        $region52: #{lstm_model_forward.1} parent=43 // pred_fallthru
          _
        %p286 = pneg %p39
        %p287 = pneg %p36
        %s288 = sand.u32 %s52, 1
        %s289 = scalar_lea.sflag [#allocation7], %s288
        %s290 = sand.u32 %s52, 1
        %s291 = smul.addr %s290, 256
        %s292 = scalar_lea.vmem [#allocation6], %s291
        %p293 = pneg %p65
        %p294 = pneg %p62
        %s295 = sand.u32 %s78, 1
        %s296 = scalar_lea.sflag [#allocation9], %s295
        %s297 = sand.u32 %s78, 1
        %s298 = smul.addr %s297, 256
        %s299 = scalar_lea.vmem [#allocation8], %s298
        %p300 = pneg %p91
        %p301 = pneg %p88
        %p302 = scmp.lt.s32.totalorder %s23, 2
        %s303 = scalar_select %p302, %s23, 2
        %s304 = smul.addr %s303, 4
        %s305 = scalar_lea.vmem %s3, %s304
        %p306 = pneg %p117
        %p307 = pneg %p114
        %p308 = pneg %p138
        %p309 = pneg %p135
        %p310 = pneg %p159
        %p311 = pneg %p156
        %p312 = pneg %p180
        %p313 = pneg %p177
        %p314 = scmp.lt.s32.totalorder %s23, 2
        %s315 = scalar_select %p314, %s23, 2
        %s316 = smul.addr %s315, 4
        %s317 = scalar_lea.vmem %s3, %s316
        %p318 = scmp.eq.s32.totalorder %s23, 0
        // Predicated region
        $region53: #{lstm_model_forward.1} parent=43 // pred_check
          %p319 = pneg %p318
        $region54: #{lstm_model_forward.1} parent=43 // pred_check_branch
          %321 = sbr.rel (%p319) target = $region56
        $region55: #{lstm_model_forward.1} parent=43 // pred_region
          %v322 = vld [vmem:[%s0] sm:$0xff]
          %v323 = vld [vmem:[%s0 + $0x8] sm:$0xff]
          %v324 = vld [vmem:[%s0 + $0x10] sm:$0xff]
          %v325 = vld [vmem:[%s0 + $0x18] sm:$0xff]
          %v326 = vld [vmem:[%s0 + $0x20] sm:$0xff]
          %v327 = vld [vmem:[%s0 + $0x28] sm:$0xff]
          %v328 = vld [vmem:[%s0 + $0x30] sm:$0xff]
          %v329 = vld [vmem:[%s0 + $0x38] sm:$0xff]
          %330 = vst [vmem:[#allocation2] sm:$0xff] %v322
          %331 = vst [vmem:[#allocation2 + $0x8] sm:$0xff] %v323
          %332 = vst [vmem:[#allocation2 + $0x10] sm:$0xff] %v324
          %333 = vst [vmem:[#allocation2 + $0x18] sm:$0xff] %v325
          %334 = vst [vmem:[#allocation2 + $0x20] sm:$0xff] %v326
          %335 = vst [vmem:[#allocation2 + $0x28] sm:$0xff] %v327
          %336 = vst [vmem:[#allocation2 + $0x30] sm:$0xff] %v328
          %337 = vst [vmem:[#allocation2 + $0x38] sm:$0xff] %v329
        $region56: #{lstm_model_forward.1} parent=43 // pred_fallthru
          _
        %v338 = vld [vmem:[%s270] sm:$0xff]
        %v339 = vld [vmem:[%s270 + $0x8] sm:$0xff]
        %v340 = vld [vmem:[%s270 + $0x10] sm:$0xff]
        %v341 = vld [vmem:[%s270 + $0x18] sm:$0xff]
        %v342 = vld [vmem:[%s270 + $0x20] sm:$0xff]
        %v343 = vld [vmem:[%s270 + $0x28] sm:$0xff]
        %v344 = vld [vmem:[%s270 + $0x30] sm:$0xff]
        %v345 = vld [vmem:[%s270 + $0x38] sm:$0xff]
        %v346 = vld [vmem:[%s270 + $0x40] sm:$0xff]
        %v347 = vld [vmem:[%s270 + $0x48] sm:$0xff]
        %v348 = vld [vmem:[%s270 + $0x50] sm:$0xff]
        %v349 = vld [vmem:[%s270 + $0x58] sm:$0xff]
        %v350 = vld [vmem:[%s270 + $0x60] sm:$0xff]
        %v351 = vld [vmem:[%s270 + $0x68] sm:$0xff]
        %v352 = vld [vmem:[%s270 + $0x70] sm:$0xff]
        %v353 = vld [vmem:[%s270 + $0x78] sm:$0xff]
        %v354 = vld [vmem:[%s270 + $0x80] sm:$0xff]
        %v355 = vld [vmem:[%s270 + $0x88] sm:$0xff]
        %v356 = vld [vmem:[%s270 + $0x90] sm:$0xff]
        %v357 = vld [vmem:[%s270 + $0x98] sm:$0xff]
        %v358 = vld [vmem:[%s270 + $0xa0] sm:$0xff]
        %v359 = vld [vmem:[%s270 + $0xa8] sm:$0xff]
        %v360 = vld [vmem:[%s270 + $0xb0] sm:$0xff]
        %v361 = vld [vmem:[%s270 + $0xb8] sm:$0xff]
        %v362 = vld [vmem:[%s270 + $0xc0] sm:$0xff]
        %v363 = vld [vmem:[%s270 + $0xc8] sm:$0xff]
        %v364 = vld [vmem:[%s270 + $0xd0] sm:$0xff]
        %v365 = vld [vmem:[%s270 + $0xd8] sm:$0xff]
        %v366 = vld [vmem:[%s270 + $0xe0] sm:$0xff]
        %v367 = vld [vmem:[%s270 + $0xe8] sm:$0xff]
        %v368 = vld [vmem:[%s270 + $0xf0] sm:$0xff]
        %v369 = vld [vmem:[%s270 + $0xf8] sm:$0xff]
        %v370 = vld [vmem:[%s280] sm:$0xff]
        %v371 = vld [vmem:[%s280 + $0x8] sm:$0xff]
        %v372 = vld [vmem:[%s280 + $0x10] sm:$0xff]
        %v373 = vld [vmem:[%s280 + $0x18] sm:$0xff]
        %v374 = vld [vmem:[%s280 + $0x20] sm:$0xff]
        %v375 = vld [vmem:[%s280 + $0x28] sm:$0xff]
        %v376 = vld [vmem:[%s280 + $0x30] sm:$0xff]
        %v377 = vld [vmem:[%s280 + $0x38] sm:$0xff]
        %v378 = vld [vmem:[%s280 + $0x40] sm:$0xff]
        %v379 = vld [vmem:[%s280 + $0x48] sm:$0xff]
        %v380 = vld [vmem:[%s280 + $0x50] sm:$0xff]
        %v381 = vld [vmem:[%s280 + $0x58] sm:$0xff]
        %v382 = vld [vmem:[%s280 + $0x60] sm:$0xff]
        %v383 = vld [vmem:[%s280 + $0x68] sm:$0xff]
        %v384 = vld [vmem:[%s280 + $0x70] sm:$0xff]
        %v385 = vld [vmem:[%s280 + $0x78] sm:$0xff]
        %v386 = vld [vmem:[%s280 + $0x80] sm:$0xff]
        %v387 = vld [vmem:[%s280 + $0x88] sm:$0xff]
        %v388 = vld [vmem:[%s280 + $0x90] sm:$0xff]
        %v389 = vld [vmem:[%s280 + $0x98] sm:$0xff]
        %v390 = vld [vmem:[%s280 + $0xa0] sm:$0xff]
        %v391 = vld [vmem:[%s280 + $0xa8] sm:$0xff]
        %v392 = vld [vmem:[%s280 + $0xb0] sm:$0xff]
        %v393 = vld [vmem:[%s280 + $0xb8] sm:$0xff]
        %v394 = vld [vmem:[%s280 + $0xc0] sm:$0xff]
        %v395 = vld [vmem:[%s280 + $0xc8] sm:$0xff]
        %v396 = vld [vmem:[%s280 + $0xd0] sm:$0xff]
        %v397 = vld [vmem:[%s280 + $0xd8] sm:$0xff]
        %v398 = vld [vmem:[%s280 + $0xe0] sm:$0xff]
        %v399 = vld [vmem:[%s280 + $0xe8] sm:$0xff]
        %v400 = vld [vmem:[%s280 + $0xf0] sm:$0xff]
        %v401 = vld [vmem:[%s280 + $0xf8] sm:$0xff]
        %v402 = vld [vmem:[%s317] sm:$0xf]
        %v403 = vld [vmem:[#allocation2] sm:$0xff]
        %v404 = vld [vmem:[#allocation2 + $0x8] sm:$0xff]
        %v405 = vld [vmem:[#allocation2 + $0x10] sm:$0xff]
        %v406 = vld [vmem:[#allocation2 + $0x18] sm:$0xff]
        %v407 = vld [vmem:[#allocation2 + $0x20] sm:$0xff]
        %v408 = vld [vmem:[#allocation2 + $0x28] sm:$0xff]
        %v409 = vld [vmem:[#allocation2 + $0x30] sm:$0xff]
        %v410 = vld [vmem:[#allocation2 + $0x38] sm:$0xff]
        %v411 = vpack.c.bf16 %v403, %v403
        %v412 = vpack.c.bf16 %v404, %v404
        %v413 = vpack.c.bf16 %v405, %v405
        %v414 = vpack.c.bf16 %v406, %v406
        %v415 = vpack.c.bf16 %v407, %v407
        %v416 = vpack.c.bf16 %v408, %v408
        %v417 = vpack.c.bf16 %v409, %v409
        %v418 = vpack.c.bf16 %v410, %v410
        %v420 = vperm.slane %v402, 0
        %v421 = vperm.slane %v402, 1
        %v422 = vperm.slane %v402, 2
        %v423 = vperm.slane %v402, 3
        %v436 = vunpack.c.l.b16 %v411
        %v437 = vunpack.c.l.b16 %v412
        %v438 = vunpack.c.l.b16 %v413
        %v439 = vunpack.c.l.b16 %v414
        %v440 = vunpack.c.l.b16 %v415
        %v441 = vunpack.c.l.b16 %v416
        %v442 = vunpack.c.l.b16 %v417
        %v443 = vunpack.c.l.b16 %v418
        %v444 = vpack.c.b16 %v437, %v436
        %v445 = vpack.c.b16 %v439, %v438
        %v446 = vpack.c.b16 %v441, %v440
        %v447 = vpack.c.b16 %v443, %v442
        %v484 = vunpack.c.l.b16 %v338
        %v485 = vunpack.c.h.b16 %v338
        %v486 = vunpack.c.l.b16 %v339
        %v487 = vunpack.c.h.b16 %v339
        %v488 = vunpack.c.l.b16 %v340
        %v489 = vunpack.c.h.b16 %v340
        %v490 = vunpack.c.l.b16 %v341
        %v491 = vunpack.c.h.b16 %v341
        %v492 = vunpack.c.l.b16 %v342
        %v493 = vunpack.c.h.b16 %v342
        %v494 = vunpack.c.l.b16 %v343
        %v495 = vunpack.c.h.b16 %v343
        %v496 = vunpack.c.l.b16 %v344
        %v497 = vunpack.c.h.b16 %v344
        %v498 = vunpack.c.l.b16 %v345
        %v499 = vunpack.c.h.b16 %v345
        %v500 = vunpack.c.l.b16 %v346
        %v501 = vunpack.c.h.b16 %v346
        %v502 = vunpack.c.l.b16 %v347
        %v503 = vunpack.c.h.b16 %v347
        %v504 = vunpack.c.l.b16 %v348
        %v505 = vunpack.c.h.b16 %v348
        %v506 = vunpack.c.l.b16 %v349
        %v507 = vunpack.c.h.b16 %v349
        %v508 = vunpack.c.l.b16 %v350
        %v509 = vunpack.c.h.b16 %v350
        %v510 = vunpack.c.l.b16 %v351
        %v511 = vunpack.c.h.b16 %v351
        %v512 = vunpack.c.l.b16 %v352
        %v513 = vunpack.c.h.b16 %v352
        %v514 = vunpack.c.l.b16 %v353
        %v515 = vunpack.c.h.b16 %v353
        %v516 = vunpack.c.l.b16 %v354
        %v517 = vunpack.c.h.b16 %v354
        %v518 = vunpack.c.l.b16 %v355
        %v519 = vunpack.c.h.b16 %v355
        %v520 = vunpack.c.l.b16 %v356
        %v521 = vunpack.c.h.b16 %v356
        %v522 = vunpack.c.l.b16 %v357
        %v523 = vunpack.c.h.b16 %v357
        %v524 = vunpack.c.l.b16 %v358
        %v525 = vunpack.c.h.b16 %v358
        %v526 = vunpack.c.l.b16 %v359
        %v527 = vunpack.c.h.b16 %v359
        %v528 = vunpack.c.l.b16 %v360
        %v529 = vunpack.c.h.b16 %v360
        %v530 = vunpack.c.l.b16 %v361
        %v531 = vunpack.c.h.b16 %v361
        %v532 = vunpack.c.l.b16 %v362
        %v533 = vunpack.c.h.b16 %v362
        %v534 = vunpack.c.l.b16 %v363
        %v535 = vunpack.c.h.b16 %v363
        %v536 = vunpack.c.l.b16 %v364
        %v537 = vunpack.c.h.b16 %v364
        %v538 = vunpack.c.l.b16 %v365
        %v539 = vunpack.c.h.b16 %v365
        %v540 = vunpack.c.l.b16 %v366
        %v541 = vunpack.c.h.b16 %v366
        %v542 = vunpack.c.l.b16 %v367
        %v543 = vunpack.c.h.b16 %v367
        %v544 = vunpack.c.l.b16 %v368
        %v545 = vunpack.c.h.b16 %v368
        %v546 = vunpack.c.l.b16 %v369
        %v547 = vunpack.c.h.b16 %v369
        %v548 = vpack.c.b16 %v488, %v484
        %v549 = vpack.c.b16 %v489, %v485
        %v550 = vpack.c.b16 %v490, %v486
        %v551 = vpack.c.b16 %v491, %v487
        %v552 = vpack.c.b16 %v496, %v492
        %v553 = vpack.c.b16 %v497, %v493
        %v554 = vpack.c.b16 %v498, %v494
        %v555 = vpack.c.b16 %v499, %v495
        %v556 = vpack.c.b16 %v504, %v500
        %v557 = vpack.c.b16 %v505, %v501
        %v558 = vpack.c.b16 %v506, %v502
        %v559 = vpack.c.b16 %v507, %v503
        %v560 = vpack.c.b16 %v512, %v508
        %v561 = vpack.c.b16 %v513, %v509
        %v562 = vpack.c.b16 %v514, %v510
        %v563 = vpack.c.b16 %v515, %v511
        %v564 = vpack.c.b16 %v520, %v516
        %v565 = vpack.c.b16 %v521, %v517
        %v566 = vpack.c.b16 %v522, %v518
        %v567 = vpack.c.b16 %v523, %v519
        %v568 = vpack.c.b16 %v528, %v524
        %v569 = vpack.c.b16 %v529, %v525
        %v570 = vpack.c.b16 %v530, %v526
        %v571 = vpack.c.b16 %v531, %v527
        %v572 = vpack.c.b16 %v536, %v532
        %v573 = vpack.c.b16 %v537, %v533
        %v574 = vpack.c.b16 %v538, %v534
        %v575 = vpack.c.b16 %v539, %v535
        %v576 = vpack.c.b16 %v544, %v540
        %v577 = vpack.c.b16 %v545, %v541
        %v578 = vpack.c.b16 %v546, %v542
        %v579 = vpack.c.b16 %v547, %v543
        %612 = vmatpush.bf16.msra.mxu0 %v576
        %613 = vmatpush.bf16.msra.mxu0 %v572
        %614 = vmatpush.bf16.msra.mxu0 %v568
        %615 = vmatpush.bf16.msra.mxu0 %v564
        %616 = vmatpush.bf16.msra.mxu0 %v560
        %617 = vmatpush.bf16.msra.mxu0 %v556
        %618 = vmatpush.bf16.msra.mxu0 %v552
        %619 = vmatpush.bf16.msra.mxu0 %v548
        %620 = vmatmul.bf16.gmra.mxu0 %v444
        %v621 = vpop.f32.mrf.mxu0
        %v622 = vadd.f32 %v420, %v621
        %v623 = vpop.f32.mrf.mxu0
        %v624 = vadd.f32 %v420, %v623
        %625 = vmatmul.bf16.gmra.mxu0 %v445
        %v626 = vpop.f32.mrf.mxu0
        %v627 = vadd.f32 %v420, %v626
        %v628 = vpop.f32.mrf.mxu0
        %v629 = vadd.f32 %v420, %v628
        %630 = vmatmul.bf16.gmra.mxu0 %v446
        %v631 = vpop.f32.mrf.mxu0
        %v632 = vadd.f32 %v420, %v631
        %v633 = vpop.f32.mrf.mxu0
        %v634 = vadd.f32 %v420, %v633
        %635 = vmatmul.bf16.gmra.mxu0 %v447
        %v636 = vpop.f32.mrf.mxu0
        %v637 = vadd.f32 %v420, %v636
        %v638 = vpop.f32.mrf.mxu0
        %v639 = vadd.f32 %v420, %v638
        %640 = vdwg.mxu0
        %641 = vmatpush.bf16.msra.mxu0 %v577
        %642 = vmatpush.bf16.msra.mxu0 %v573
        %643 = vmatpush.bf16.msra.mxu0 %v569
        %644 = vmatpush.bf16.msra.mxu0 %v565
        %645 = vmatpush.bf16.msra.mxu0 %v561
        %646 = vmatpush.bf16.msra.mxu0 %v557
        %647 = vmatpush.bf16.msra.mxu0 %v553
        %648 = vmatpush.bf16.msra.mxu0 %v549
        %649 = vmatmul.bf16.gmra.mxu0 %v444
        %v650 = vpop.f32.mrf.mxu0
        %v651 = vadd.f32 %v421, %v650
        %v652 = vpop.f32.mrf.mxu0
        %v653 = vadd.f32 %v421, %v652
        %654 = vmatmul.bf16.gmra.mxu0 %v445
        %v655 = vpop.f32.mrf.mxu0
        %v656 = vadd.f32 %v421, %v655
        %v657 = vpop.f32.mrf.mxu0
        %v658 = vadd.f32 %v421, %v657
        %659 = vmatmul.bf16.gmra.mxu0 %v446
        %v660 = vpop.f32.mrf.mxu0
        %v661 = vadd.f32 %v421, %v660
        %v662 = vpop.f32.mrf.mxu0
        %v663 = vadd.f32 %v421, %v662
        %664 = vmatmul.bf16.gmra.mxu0 %v447
        %v665 = vpop.f32.mrf.mxu0
        %v666 = vadd.f32 %v421, %v665
        %v667 = vpop.f32.mrf.mxu0
        %v668 = vadd.f32 %v421, %v667
        %669 = vdwg.mxu0
        %670 = vmatpush.bf16.msra.mxu0 %v578
        %671 = vmatpush.bf16.msra.mxu0 %v574
        %672 = vmatpush.bf16.msra.mxu0 %v570
        %673 = vmatpush.bf16.msra.mxu0 %v566
        %674 = vmatpush.bf16.msra.mxu0 %v562
        %675 = vmatpush.bf16.msra.mxu0 %v558
        %676 = vmatpush.bf16.msra.mxu0 %v554
        %677 = vmatpush.bf16.msra.mxu0 %v550
        %678 = vmatmul.bf16.gmra.mxu0 %v444
        %v679 = vpop.f32.mrf.mxu0
        %v680 = vadd.f32 %v422, %v679
        %v681 = vpop.f32.mrf.mxu0
        %v682 = vadd.f32 %v422, %v681
        %683 = vmatmul.bf16.gmra.mxu0 %v445
        %v684 = vpop.f32.mrf.mxu0
        %v685 = vadd.f32 %v422, %v684
        %v686 = vpop.f32.mrf.mxu0
        %v687 = vadd.f32 %v422, %v686
        %688 = vmatmul.bf16.gmra.mxu0 %v446
        %v689 = vpop.f32.mrf.mxu0
        %v690 = vadd.f32 %v422, %v689
        %v691 = vpop.f32.mrf.mxu0
        %v692 = vadd.f32 %v422, %v691
        %693 = vmatmul.bf16.gmra.mxu0 %v447
        %v694 = vpop.f32.mrf.mxu0
        %v695 = vadd.f32 %v422, %v694
        %v696 = vpop.f32.mrf.mxu0
        %v697 = vadd.f32 %v422, %v696
        %698 = vdwg.mxu0
        %699 = vmatpush.bf16.msra.mxu0 %v579
        %700 = vmatpush.bf16.msra.mxu0 %v575
        %701 = vmatpush.bf16.msra.mxu0 %v571
        %702 = vmatpush.bf16.msra.mxu0 %v567
        %703 = vmatpush.bf16.msra.mxu0 %v563
        %704 = vmatpush.bf16.msra.mxu0 %v559
        %705 = vmatpush.bf16.msra.mxu0 %v555
        %706 = vmatpush.bf16.msra.mxu0 %v551
        %707 = vmatmul.bf16.gmra.mxu0 %v444
        %v708 = vpop.f32.mrf.mxu0
        %v709 = vadd.f32 %v423, %v708
        %v710 = vpop.f32.mrf.mxu0
        %v711 = vadd.f32 %v423, %v710
        %712 = vmatmul.bf16.gmra.mxu0 %v445
        %v713 = vpop.f32.mrf.mxu0
        %v714 = vadd.f32 %v423, %v713
        %v715 = vpop.f32.mrf.mxu0
        %v716 = vadd.f32 %v423, %v715
        %717 = vmatmul.bf16.gmra.mxu0 %v446
        %v718 = vpop.f32.mrf.mxu0
        %v719 = vadd.f32 %v423, %v718
        %v720 = vpop.f32.mrf.mxu0
        %v721 = vadd.f32 %v423, %v720
        %722 = vmatmul.bf16.gmra.mxu0 %v447
        %v723 = vpop.f32.mrf.mxu0
        %v724 = vadd.f32 %v423, %v723
        %v725 = vpop.f32.mrf.mxu0
        %v726 = vadd.f32 %v423, %v725
        %727 = vdwg.mxu0
        %728 = vst [vmem:[#allocation3] sm:$0xff] %v622
        %729 = vst [vmem:[#allocation3 + $0x8] sm:$0xff] %v651
        %730 = vst [vmem:[#allocation3 + $0x10] sm:$0xff] %v680
        %731 = vst [vmem:[#allocation3 + $0x18] sm:$0xff] %v709
        %732 = vst [vmem:[#allocation3 + $0x20] sm:$0xff] %v624
        %733 = vst [vmem:[#allocation3 + $0x28] sm:$0xff] %v653
        %734 = vst [vmem:[#allocation3 + $0x30] sm:$0xff] %v682
        %735 = vst [vmem:[#allocation3 + $0x38] sm:$0xff] %v711
        %736 = vst [vmem:[#allocation3 + $0x40] sm:$0xff] %v627
        %737 = vst [vmem:[#allocation3 + $0x48] sm:$0xff] %v656
        %738 = vst [vmem:[#allocation3 + $0x50] sm:$0xff] %v685
        %739 = vst [vmem:[#allocation3 + $0x58] sm:$0xff] %v714
        %740 = vst [vmem:[#allocation3 + $0x60] sm:$0xff] %v629
        %741 = vst [vmem:[#allocation3 + $0x68] sm:$0xff] %v658
        %742 = vst [vmem:[#allocation3 + $0x70] sm:$0xff] %v687
        %743 = vst [vmem:[#allocation3 + $0x78] sm:$0xff] %v716
        %744 = vst [vmem:[#allocation3 + $0x80] sm:$0xff] %v632
        %745 = vst [vmem:[#allocation3 + $0x88] sm:$0xff] %v661
        %746 = vst [vmem:[#allocation3 + $0x90] sm:$0xff] %v690
        %747 = vst [vmem:[#allocation3 + $0x98] sm:$0xff] %v719
        %748 = vst [vmem:[#allocation3 + $0xa0] sm:$0xff] %v634
        %749 = vst [vmem:[#allocation3 + $0xa8] sm:$0xff] %v663
        %750 = vst [vmem:[#allocation3 + $0xb0] sm:$0xff] %v692
        %751 = vst [vmem:[#allocation3 + $0xb8] sm:$0xff] %v721
        %752 = vst [vmem:[#allocation3 + $0xc0] sm:$0xff] %v637
        %753 = vst [vmem:[#allocation3 + $0xc8] sm:$0xff] %v666
        %754 = vst [vmem:[#allocation3 + $0xd0] sm:$0xff] %v695
        %755 = vst [vmem:[#allocation3 + $0xd8] sm:$0xff] %v724
        %756 = vst [vmem:[#allocation3 + $0xe0] sm:$0xff] %v639
        %757 = vst [vmem:[#allocation3 + $0xe8] sm:$0xff] %v668
        %758 = vst [vmem:[#allocation3 + $0xf0] sm:$0xff] %v697
        %759 = vst [vmem:[#allocation3 + $0xf8] sm:$0xff] %v726
        %760 = vst [vmem:[#allocation4] sm:$0xff] 0.0
        %761 = vst [vmem:[#allocation5] sm:$0xff] 0.0
        %v762 = vld [vmem:[#allocation3] sm:$0xff]
        %v763 = vld [vmem:[#allocation3 + $0x8] sm:$0xff]
        %v764 = vld [vmem:[#allocation3 + $0x10] sm:$0xff]
        %v765 = vld [vmem:[#allocation3 + $0x18] sm:$0xff]
        %v766 = vld [vmem:[#allocation4] sm:$0xff]
        %v767 = vpack.c.bf16 %v766, %v766
        %v800 = vunpack.c.l.b16 %v370
        %v801 = vunpack.c.h.b16 %v370
        %v802 = vunpack.c.l.b16 %v371
        %v803 = vunpack.c.h.b16 %v371
        %v804 = vunpack.c.l.b16 %v372
        %v805 = vunpack.c.h.b16 %v372
        %v806 = vunpack.c.l.b16 %v373
        %v807 = vunpack.c.h.b16 %v373
        %v808 = vunpack.c.l.b16 %v374
        %v809 = vunpack.c.h.b16 %v374
        %v810 = vunpack.c.l.b16 %v375
        %v811 = vunpack.c.h.b16 %v375
        %v812 = vunpack.c.l.b16 %v376
        %v813 = vunpack.c.h.b16 %v376
        %v814 = vunpack.c.l.b16 %v377
        %v815 = vunpack.c.h.b16 %v377
        %v816 = vunpack.c.l.b16 %v378
        %v817 = vunpack.c.h.b16 %v378
        %v818 = vunpack.c.l.b16 %v379
        %v819 = vunpack.c.h.b16 %v379
        %v820 = vunpack.c.l.b16 %v380
        %v821 = vunpack.c.h.b16 %v380
        %v822 = vunpack.c.l.b16 %v381
        %v823 = vunpack.c.h.b16 %v381
        %v824 = vunpack.c.l.b16 %v382
        %v825 = vunpack.c.h.b16 %v382
        %v826 = vunpack.c.l.b16 %v383
        %v827 = vunpack.c.h.b16 %v383
        %v828 = vunpack.c.l.b16 %v384
        %v829 = vunpack.c.h.b16 %v384
        %v830 = vunpack.c.l.b16 %v385
        %v831 = vunpack.c.h.b16 %v385
        %v832 = vunpack.c.l.b16 %v386
        %v833 = vunpack.c.h.b16 %v386
        %v834 = vunpack.c.l.b16 %v387
        %v835 = vunpack.c.h.b16 %v387
        %v836 = vunpack.c.l.b16 %v388
        %v837 = vunpack.c.h.b16 %v388
        %v838 = vunpack.c.l.b16 %v389
        %v839 = vunpack.c.h.b16 %v389
        %v840 = vunpack.c.l.b16 %v390
        %v841 = vunpack.c.h.b16 %v390
        %v842 = vunpack.c.l.b16 %v391
        %v843 = vunpack.c.h.b16 %v391
        %v844 = vunpack.c.l.b16 %v392
        %v845 = vunpack.c.h.b16 %v392
        %v846 = vunpack.c.l.b16 %v393
        %v847 = vunpack.c.h.b16 %v393
        %v848 = vunpack.c.l.b16 %v394
        %v849 = vunpack.c.h.b16 %v394
        %v850 = vunpack.c.l.b16 %v395
        %v851 = vunpack.c.h.b16 %v395
        %v852 = vunpack.c.l.b16 %v396
        %v853 = vunpack.c.h.b16 %v396
        %v854 = vunpack.c.l.b16 %v397
        %v855 = vunpack.c.h.b16 %v397
        %v856 = vunpack.c.l.b16 %v398
        %v857 = vunpack.c.h.b16 %v398
        %v858 = vunpack.c.l.b16 %v399
        %v859 = vunpack.c.h.b16 %v399
        %v860 = vunpack.c.l.b16 %v400
        %v861 = vunpack.c.h.b16 %v400
        %v862 = vunpack.c.l.b16 %v401
        %v863 = vunpack.c.h.b16 %v401
        %v864 = vpack.c.b16 %v804, %v800
        %v865 = vpack.c.b16 %v805, %v801
        %v866 = vpack.c.b16 %v806, %v802
        %v867 = vpack.c.b16 %v807, %v803
        %v868 = vpack.c.b16 %v812, %v808
        %v869 = vpack.c.b16 %v813, %v809
        %v870 = vpack.c.b16 %v814, %v810
        %v871 = vpack.c.b16 %v815, %v811
        %v872 = vpack.c.b16 %v820, %v816
        %v873 = vpack.c.b16 %v821, %v817
        %v874 = vpack.c.b16 %v822, %v818
        %v875 = vpack.c.b16 %v823, %v819
        %v876 = vpack.c.b16 %v828, %v824
        %v877 = vpack.c.b16 %v829, %v825
        %v878 = vpack.c.b16 %v830, %v826
        %v879 = vpack.c.b16 %v831, %v827
        %v880 = vpack.c.b16 %v836, %v832
        %v881 = vpack.c.b16 %v837, %v833
        %v882 = vpack.c.b16 %v838, %v834
        %v883 = vpack.c.b16 %v839, %v835
        %v884 = vpack.c.b16 %v844, %v840
        %v885 = vpack.c.b16 %v845, %v841
        %v886 = vpack.c.b16 %v846, %v842
        %v887 = vpack.c.b16 %v847, %v843
        %v888 = vpack.c.b16 %v852, %v848
        %v889 = vpack.c.b16 %v853, %v849
        %v890 = vpack.c.b16 %v854, %v850
        %v891 = vpack.c.b16 %v855, %v851
        %v892 = vpack.c.b16 %v860, %v856
        %v893 = vpack.c.b16 %v861, %v857
        %v894 = vpack.c.b16 %v862, %v858
        %v895 = vpack.c.b16 %v863, %v859
        %928 = vmatpush.bf16.msra.mxu0 %v892
        %929 = vmatpush.bf16.msra.mxu0 %v888
        %930 = vmatpush.bf16.msra.mxu0 %v884
        %931 = vmatpush.bf16.msra.mxu0 %v880
        %932 = vmatpush.bf16.msra.mxu0 %v876
        %933 = vmatpush.bf16.msra.mxu0 %v872
        %934 = vmatpush.bf16.msra.mxu0 %v868
        %935 = vmatpush.bf16.msra.mxu0 %v864
        %936 = vmatmul.bf16.gmra.mxu0 %v767
        %v937 = vpop.f32.mrf.mxu0
        %v938 = vadd.f32 0.0, %v937
        %v939 = vpop.f32.mrf.mxu0
        %940 = vdwg.mxu0
        %941 = vmatpush.bf16.msra.mxu0 %v893
        %942 = vmatpush.bf16.msra.mxu0 %v889
        %943 = vmatpush.bf16.msra.mxu0 %v885
        %944 = vmatpush.bf16.msra.mxu0 %v881
        %945 = vmatpush.bf16.msra.mxu0 %v877
        %946 = vmatpush.bf16.msra.mxu0 %v873
        %947 = vmatpush.bf16.msra.mxu0 %v869
        %948 = vmatpush.bf16.msra.mxu0 %v865
        %949 = vmatmul.bf16.gmra.mxu0 %v767
        %v950 = vpop.f32.mrf.mxu0
        %v951 = vadd.f32 0.0, %v950
        %v952 = vpop.f32.mrf.mxu0
        %953 = vdwg.mxu0
        %954 = vmatpush.bf16.msra.mxu0 %v894
        %955 = vmatpush.bf16.msra.mxu0 %v890
        %956 = vmatpush.bf16.msra.mxu0 %v886
        %957 = vmatpush.bf16.msra.mxu0 %v882
        %958 = vmatpush.bf16.msra.mxu0 %v878
        %959 = vmatpush.bf16.msra.mxu0 %v874
        %960 = vmatpush.bf16.msra.mxu0 %v870
        %961 = vmatpush.bf16.msra.mxu0 %v866
        %962 = vmatmul.bf16.gmra.mxu0 %v767
        %v963 = vpop.f32.mrf.mxu0
        %v964 = vadd.f32 0.0, %v963
        %v965 = vpop.f32.mrf.mxu0
        %966 = vdwg.mxu0
        %967 = vmatpush.bf16.msra.mxu0 %v895
        %968 = vmatpush.bf16.msra.mxu0 %v891
        %969 = vmatpush.bf16.msra.mxu0 %v887
        %970 = vmatpush.bf16.msra.mxu0 %v883
        %971 = vmatpush.bf16.msra.mxu0 %v879
        %972 = vmatpush.bf16.msra.mxu0 %v875
        %973 = vmatpush.bf16.msra.mxu0 %v871
        %974 = vmatpush.bf16.msra.mxu0 %v867
        %975 = vmatmul.bf16.gmra.mxu0 %v767
        %v976 = vpop.f32.mrf.mxu0
        %v977 = vadd.f32 0.0, %v976
        %v978 = vpop.f32.mrf.mxu0
        %979 = vdwg.mxu0
        %v980 = vadd.f32 %v762, %v938
        %v981 = vadd.f32 %v763, %v951
        %v982 = vadd.f32 %v764, %v964
        %v983 = vadd.f32 %v765, %v977
        %v984 = vxor.u32 %v980, 2147483648
        %v985 = vxor.u32 %v981, 2147483648
        %v986 = vxor.u32 %v982, 2147483648
        %v987 = vmul.f32 %v984, 1.442695
        %v988 = vpow.pop %v987
        %v989 = vmul.f32 %v985, 1.442695
        %v990 = vpow.pop %v989
        %v991 = vmul.f32 %v986, 1.442695
        %v992 = vpow.pop %v991
        %v993 = vadd.f32 %v988, 1.0
        %v994 = vadd.f32 %v990, 1.0
        %v995 = vadd.f32 %v992, 1.0
        %v996 = vrcp.pop %v993
        %v997 = vmul.f32 %v993, %v996
        %v998 = vsub.f32 1.0, %v997
        %v999 = vmul.f32 %v996, %v998
        %v1000 = vadd.f32 %v996, %v999
        %vm1001 = vweird.f32 %v993
        %vm1002 = vweird.f32 %v996
        %vm1003 = vmor %vm1001, %vm1002
        %v1004 = vsel %vm1003, %v996, %v1000
        %v1005 = vand.u32 2147483647, %v993
        %vm1006 = vcmp.eq.f32.partialorder %v1005, 8.507059e+37
        %v1007 = vand.u32 %v993, 2147483648
        %v1008 = vor.u32 1.1754944e-38, %v1007
        %v1009 = vsel %vm1006, %v1008, %v1004
        %v1010 = vmul.f32 1.0, %v1009
        %v1011 = vrcp.pop %v994
        %v1012 = vmul.f32 %v994, %v1011
        %v1013 = vsub.f32 1.0, %v1012
        %v1014 = vmul.f32 %v1011, %v1013
        %v1015 = vadd.f32 %v1011, %v1014
        %vm1016 = vweird.f32 %v994
        %vm1017 = vweird.f32 %v1011
        %vm1018 = vmor %vm1016, %vm1017
        %v1019 = vsel %vm1018, %v1011, %v1015
        %v1020 = vand.u32 2147483647, %v994
        %vm1021 = vcmp.eq.f32.partialorder %v1020, 8.507059e+37
        %v1022 = vand.u32 %v994, 2147483648
        %v1023 = vor.u32 1.1754944e-38, %v1022
        %v1024 = vsel %vm1021, %v1023, %v1019
        %v1025 = vmul.f32 1.0, %v1024
        %v1026 = vrcp.pop %v995
        %v1027 = vmul.f32 %v995, %v1026
        %v1028 = vsub.f32 1.0, %v1027
        %v1029 = vmul.f32 %v1026, %v1028
        %v1030 = vadd.f32 %v1026, %v1029
        %vm1031 = vweird.f32 %v995
        %vm1032 = vweird.f32 %v1026
        %vm1033 = vmor %vm1031, %vm1032
        %v1034 = vsel %vm1033, %v1026, %v1030
        %v1035 = vand.u32 2147483647, %v995
        %vm1036 = vcmp.eq.f32.partialorder %v1035, 8.507059e+37
        %v1037 = vand.u32 %v995, 2147483648
        %v1038 = vor.u32 1.1754944e-38, %v1037
        %v1039 = vsel %vm1036, %v1038, %v1034
        %v1040 = vmul.f32 1.0, %v1039
        %v1041 = vtanh.pop %v983
        %v1042 = vld [vmem:[#allocation5] sm:$0xff]
        %v1043 = vmul.f32 %v1025, %v1042
        %v1044 = vmul.f32 %v1010, %v1041
        %v1045 = vadd.f32 %v1043, %v1044
        %v1046 = vtanh.pop %v1045
        %v1047 = vmul.f32 %v1040, %v1046
        %1048 = vst [vmem:[#allocation5] sm:$0xff] %v1045
        %1049 = vst [vmem:[#allocation4] sm:$0xff] %v1047
        %1050 = vst [vmem:[#allocation2] sm:$0xff] %v1047
        %s1051 = scalar_lea.vmem [#allocation3], 32
        %v1052 = vld [vmem:[%s1051] sm:$0xff]
        %v1053 = vld [vmem:[%s1051 + $0x8] sm:$0xff]
        %v1054 = vld [vmem:[%s1051 + $0x10] sm:$0xff]
        %v1055 = vld [vmem:[%s1051 + $0x18] sm:$0xff]
        %v1056 = vld [vmem:[#allocation4] sm:$0xff]
        %v1057 = vpack.c.bf16 %v1056, %v1056
        %1058 = vmatpush.bf16.msra.mxu0 %v892
        %1059 = vmatpush.bf16.msra.mxu0 %v888
        %1060 = vmatpush.bf16.msra.mxu0 %v884
        %1061 = vmatpush.bf16.msra.mxu0 %v880
        %1062 = vmatpush.bf16.msra.mxu0 %v876
        %1063 = vmatpush.bf16.msra.mxu0 %v872
        %1064 = vmatpush.bf16.msra.mxu0 %v868
        %1065 = vmatpush.bf16.msra.mxu0 %v864
        %1066 = vmatmul.bf16.gmra.mxu0 %v1057
        %v1067 = vpop.f32.mrf.mxu0
        %v1068 = vadd.f32 0.0, %v1067
        %v1069 = vpop.f32.mrf.mxu0
        %1070 = vdwg.mxu0
        %1071 = vmatpush.bf16.msra.mxu0 %v893
        %1072 = vmatpush.bf16.msra.mxu0 %v889
        %1073 = vmatpush.bf16.msra.mxu0 %v885
        %1074 = vmatpush.bf16.msra.mxu0 %v881
        %1075 = vmatpush.bf16.msra.mxu0 %v877
        %1076 = vmatpush.bf16.msra.mxu0 %v873
        %1077 = vmatpush.bf16.msra.mxu0 %v869
        %1078 = vmatpush.bf16.msra.mxu0 %v865
        %1079 = vmatmul.bf16.gmra.mxu0 %v1057
        %v1080 = vpop.f32.mrf.mxu0
        %v1081 = vadd.f32 0.0, %v1080
        %v1082 = vpop.f32.mrf.mxu0
        %1083 = vdwg.mxu0
        %1084 = vmatpush.bf16.msra.mxu0 %v894
        %1085 = vmatpush.bf16.msra.mxu0 %v890
        %1086 = vmatpush.bf16.msra.mxu0 %v886
        %1087 = vmatpush.bf16.msra.mxu0 %v882
        %1088 = vmatpush.bf16.msra.mxu0 %v878
        %1089 = vmatpush.bf16.msra.mxu0 %v874
        %1090 = vmatpush.bf16.msra.mxu0 %v870
        %1091 = vmatpush.bf16.msra.mxu0 %v866
        %1092 = vmatmul.bf16.gmra.mxu0 %v1057
        %v1093 = vpop.f32.mrf.mxu0
        %v1094 = vadd.f32 0.0, %v1093
        %v1095 = vpop.f32.mrf.mxu0
        %1096 = vdwg.mxu0
        %1097 = vmatpush.bf16.msra.mxu0 %v895
        %1098 = vmatpush.bf16.msra.mxu0 %v891
        %1099 = vmatpush.bf16.msra.mxu0 %v887
        %1100 = vmatpush.bf16.msra.mxu0 %v883
        %1101 = vmatpush.bf16.msra.mxu0 %v879
        %1102 = vmatpush.bf16.msra.mxu0 %v875
        %1103 = vmatpush.bf16.msra.mxu0 %v871
        %1104 = vmatpush.bf16.msra.mxu0 %v867
        %1105 = vmatmul.bf16.gmra.mxu0 %v1057
        %v1106 = vpop.f32.mrf.mxu0
        %v1107 = vadd.f32 0.0, %v1106
        %v1108 = vpop.f32.mrf.mxu0
        %1109 = vdwg.mxu0
        %v1110 = vadd.f32 %v1052, %v1068
        %v1111 = vadd.f32 %v1053, %v1081
        %v1112 = vadd.f32 %v1054, %v1094
        %v1113 = vadd.f32 %v1055, %v1107
        %v1114 = vxor.u32 %v1110, 2147483648
        %v1115 = vxor.u32 %v1111, 2147483648
        %v1116 = vxor.u32 %v1112, 2147483648
        %v1117 = vmul.f32 %v1114, 1.442695
        %v1118 = vpow.pop %v1117
        %v1119 = vmul.f32 %v1115, 1.442695
        %v1120 = vpow.pop %v1119
        %v1121 = vmul.f32 %v1116, 1.442695
        %v1122 = vpow.pop %v1121
        %v1123 = vadd.f32 %v1118, 1.0
        %v1124 = vadd.f32 %v1120, 1.0
        %v1125 = vadd.f32 %v1122, 1.0
        %v1126 = vrcp.pop %v1123
        %v1127 = vmul.f32 %v1123, %v1126
        %v1128 = vsub.f32 1.0, %v1127
        %v1129 = vmul.f32 %v1126, %v1128
        %v1130 = vadd.f32 %v1126, %v1129
        %vm1131 = vweird.f32 %v1123
        %vm1132 = vweird.f32 %v1126
        %vm1133 = vmor %vm1131, %vm1132
        %v1134 = vsel %vm1133, %v1126, %v1130
        %v1135 = vand.u32 2147483647, %v1123
        %vm1136 = vcmp.eq.f32.partialorder %v1135, 8.507059e+37
        %v1137 = vand.u32 %v1123, 2147483648
        %v1138 = vor.u32 1.1754944e-38, %v1137
        %v1139 = vsel %vm1136, %v1138, %v1134
        %v1140 = vmul.f32 1.0, %v1139
        %v1141 = vrcp.pop %v1124
        %v1142 = vmul.f32 %v1124, %v1141
        %v1143 = vsub.f32 1.0, %v1142
        %v1144 = vmul.f32 %v1141, %v1143
        %v1145 = vadd.f32 %v1141, %v1144
        %vm1146 = vweird.f32 %v1124
        %vm1147 = vweird.f32 %v1141
        %vm1148 = vmor %vm1146, %vm1147
        %v1149 = vsel %vm1148, %v1141, %v1145
        %v1150 = vand.u32 2147483647, %v1124
        %vm1151 = vcmp.eq.f32.partialorder %v1150, 8.507059e+37
        %v1152 = vand.u32 %v1124, 2147483648
        %v1153 = vor.u32 1.1754944e-38, %v1152
        %v1154 = vsel %vm1151, %v1153, %v1149
        %v1155 = vmul.f32 1.0, %v1154
        %v1156 = vrcp.pop %v1125
        %v1157 = vmul.f32 %v1125, %v1156
        %v1158 = vsub.f32 1.0, %v1157
        %v1159 = vmul.f32 %v1156, %v1158
        %v1160 = vadd.f32 %v1156, %v1159
        %vm1161 = vweird.f32 %v1125
        %vm1162 = vweird.f32 %v1156
        %vm1163 = vmor %vm1161, %vm1162
        %v1164 = vsel %vm1163, %v1156, %v1160
        %v1165 = vand.u32 2147483647, %v1125
        %vm1166 = vcmp.eq.f32.partialorder %v1165, 8.507059e+37
        %v1167 = vand.u32 %v1125, 2147483648
        %v1168 = vor.u32 1.1754944e-38, %v1167
        %v1169 = vsel %vm1166, %v1168, %v1164
        %v1170 = vmul.f32 1.0, %v1169
        %v1171 = vtanh.pop %v1113
        %v1172 = vld [vmem:[#allocation5] sm:$0xff]
        %v1173 = vmul.f32 %v1155, %v1172
        %v1174 = vmul.f32 %v1140, %v1171
        %v1175 = vadd.f32 %v1173, %v1174
        %v1176 = vtanh.pop %v1175
        %v1177 = vmul.f32 %v1170, %v1176
        %1178 = vst [vmem:[#allocation5] sm:$0xff] %v1175
        %1179 = vst [vmem:[#allocation4] sm:$0xff] %v1177
        %s1180 = scalar_lea.vmem [#allocation2], 8
        %1181 = vst [vmem:[%s1180] sm:$0xff] %v1177
        %s1182 = scalar_lea.vmem [#allocation3], 64
        %v1183 = vld [vmem:[%s1182] sm:$0xff]
        %v1184 = vld [vmem:[%s1182 + $0x8] sm:$0xff]
        %v1185 = vld [vmem:[%s1182 + $0x10] sm:$0xff]
        %v1186 = vld [vmem:[%s1182 + $0x18] sm:$0xff]
        %v1187 = vld [vmem:[#allocation4] sm:$0xff]
        %v1188 = vpack.c.bf16 %v1187, %v1187
        %1189 = vmatpush.bf16.msra.mxu0 %v892
        %1190 = vmatpush.bf16.msra.mxu0 %v888
        %1191 = vmatpush.bf16.msra.mxu0 %v884
        %1192 = vmatpush.bf16.msra.mxu0 %v880
        %1193 = vmatpush.bf16.msra.mxu0 %v876
        %1194 = vmatpush.bf16.msra.mxu0 %v872
        %1195 = vmatpush.bf16.msra.mxu0 %v868
        %1196 = vmatpush.bf16.msra.mxu0 %v864
        %1197 = vmatmul.bf16.gmra.mxu0 %v1188
        %v1198 = vpop.f32.mrf.mxu0
        %v1199 = vadd.f32 0.0, %v1198
        %v1200 = vpop.f32.mrf.mxu0
        %1201 = vdwg.mxu0
        %1202 = vmatpush.bf16.msra.mxu0 %v893
        %1203 = vmatpush.bf16.msra.mxu0 %v889
        %1204 = vmatpush.bf16.msra.mxu0 %v885
        %1205 = vmatpush.bf16.msra.mxu0 %v881
        %1206 = vmatpush.bf16.msra.mxu0 %v877
        %1207 = vmatpush.bf16.msra.mxu0 %v873
        %1208 = vmatpush.bf16.msra.mxu0 %v869
        %1209 = vmatpush.bf16.msra.mxu0 %v865
        %1210 = vmatmul.bf16.gmra.mxu0 %v1188
        %v1211 = vpop.f32.mrf.mxu0
        %v1212 = vadd.f32 0.0, %v1211
        %v1213 = vpop.f32.mrf.mxu0
        %1214 = vdwg.mxu0
        %1215 = vmatpush.bf16.msra.mxu0 %v894
        %1216 = vmatpush.bf16.msra.mxu0 %v890
        %1217 = vmatpush.bf16.msra.mxu0 %v886
        %1218 = vmatpush.bf16.msra.mxu0 %v882
        %1219 = vmatpush.bf16.msra.mxu0 %v878
        %1220 = vmatpush.bf16.msra.mxu0 %v874
        %1221 = vmatpush.bf16.msra.mxu0 %v870
        %1222 = vmatpush.bf16.msra.mxu0 %v866
        %1223 = vmatmul.bf16.gmra.mxu0 %v1188
        %v1224 = vpop.f32.mrf.mxu0
        %v1225 = vadd.f32 0.0, %v1224
        %v1226 = vpop.f32.mrf.mxu0
        %1227 = vdwg.mxu0
        %1228 = vmatpush.bf16.msra.mxu0 %v895
        %1229 = vmatpush.bf16.msra.mxu0 %v891
        %1230 = vmatpush.bf16.msra.mxu0 %v887
        %1231 = vmatpush.bf16.msra.mxu0 %v883
        %1232 = vmatpush.bf16.msra.mxu0 %v879
        %1233 = vmatpush.bf16.msra.mxu0 %v875
        %1234 = vmatpush.bf16.msra.mxu0 %v871
        %1235 = vmatpush.bf16.msra.mxu0 %v867
        %1236 = vmatmul.bf16.gmra.mxu0 %v1188
        %v1237 = vpop.f32.mrf.mxu0
        %v1238 = vadd.f32 0.0, %v1237
        %v1239 = vpop.f32.mrf.mxu0
        %1240 = vdwg.mxu0
        %v1241 = vadd.f32 %v1183, %v1199
        %v1242 = vadd.f32 %v1184, %v1212
        %v1243 = vadd.f32 %v1185, %v1225
        %v1244 = vadd.f32 %v1186, %v1238
        %v1245 = vxor.u32 %v1241, 2147483648
        %v1246 = vxor.u32 %v1242, 2147483648
        %v1247 = vxor.u32 %v1243, 2147483648
        %v1248 = vmul.f32 %v1245, 1.442695
        %v1249 = vpow.pop %v1248
        %v1250 = vmul.f32 %v1246, 1.442695
        %v1251 = vpow.pop %v1250
        %v1252 = vmul.f32 %v1247, 1.442695
        %v1253 = vpow.pop %v1252
        %v1254 = vadd.f32 %v1249, 1.0
        %v1255 = vadd.f32 %v1251, 1.0
        %v1256 = vadd.f32 %v1253, 1.0
        %v1257 = vrcp.pop %v1254
        %v1258 = vmul.f32 %v1254, %v1257
        %v1259 = vsub.f32 1.0, %v1258
        %v1260 = vmul.f32 %v1257, %v1259
        %v1261 = vadd.f32 %v1257, %v1260
        %vm1262 = vweird.f32 %v1254
        %vm1263 = vweird.f32 %v1257
        %vm1264 = vmor %vm1262, %vm1263
        %v1265 = vsel %vm1264, %v1257, %v1261
        %v1266 = vand.u32 2147483647, %v1254
        %vm1267 = vcmp.eq.f32.partialorder %v1266, 8.507059e+37
        %v1268 = vand.u32 %v1254, 2147483648
        %v1269 = vor.u32 1.1754944e-38, %v1268
        %v1270 = vsel %vm1267, %v1269, %v1265
        %v1271 = vmul.f32 1.0, %v1270
        %v1272 = vrcp.pop %v1255
        %v1273 = vmul.f32 %v1255, %v1272
        %v1274 = vsub.f32 1.0, %v1273
        %v1275 = vmul.f32 %v1272, %v1274
        %v1276 = vadd.f32 %v1272, %v1275
        %vm1277 = vweird.f32 %v1255
        %vm1278 = vweird.f32 %v1272
        %vm1279 = vmor %vm1277, %vm1278
        %v1280 = vsel %vm1279, %v1272, %v1276
        %v1281 = vand.u32 2147483647, %v1255
        %vm1282 = vcmp.eq.f32.partialorder %v1281, 8.507059e+37
        %v1283 = vand.u32 %v1255, 2147483648
        %v1284 = vor.u32 1.1754944e-38, %v1283
        %v1285 = vsel %vm1282, %v1284, %v1280
        %v1286 = vmul.f32 1.0, %v1285
        %v1287 = vrcp.pop %v1256
        %v1288 = vmul.f32 %v1256, %v1287
        %v1289 = vsub.f32 1.0, %v1288
        %v1290 = vmul.f32 %v1287, %v1289
        %v1291 = vadd.f32 %v1287, %v1290
        %vm1292 = vweird.f32 %v1256
        %vm1293 = vweird.f32 %v1287
        %vm1294 = vmor %vm1292, %vm1293
        %v1295 = vsel %vm1294, %v1287, %v1291
        %v1296 = vand.u32 2147483647, %v1256
        %vm1297 = vcmp.eq.f32.partialorder %v1296, 8.507059e+37
        %v1298 = vand.u32 %v1256, 2147483648
        %v1299 = vor.u32 1.1754944e-38, %v1298
        %v1300 = vsel %vm1297, %v1299, %v1295
        %v1301 = vmul.f32 1.0, %v1300
        %v1302 = vtanh.pop %v1244
        %v1303 = vld [vmem:[#allocation5] sm:$0xff]
        %v1304 = vmul.f32 %v1286, %v1303
        %v1305 = vmul.f32 %v1271, %v1302
        %v1306 = vadd.f32 %v1304, %v1305
        %v1307 = vtanh.pop %v1306
        %v1308 = vmul.f32 %v1301, %v1307
        %1309 = vst [vmem:[#allocation5] sm:$0xff] %v1306
        %1310 = vst [vmem:[#allocation4] sm:$0xff] %v1308
        %s1311 = scalar_lea.vmem [#allocation2], 16
        %1312 = vst [vmem:[%s1311] sm:$0xff] %v1308
        %s1313 = scalar_lea.vmem [#allocation3], 96
        %v1314 = vld [vmem:[%s1313] sm:$0xff]
        %v1315 = vld [vmem:[%s1313 + $0x8] sm:$0xff]
        %v1316 = vld [vmem:[%s1313 + $0x10] sm:$0xff]
        %v1317 = vld [vmem:[%s1313 + $0x18] sm:$0xff]
        %v1318 = vld [vmem:[#allocation4] sm:$0xff]
        %v1319 = vpack.c.bf16 %v1318, %v1318
        %1320 = vmatpush.bf16.msra.mxu0 %v892
        %1321 = vmatpush.bf16.msra.mxu0 %v888
        %1322 = vmatpush.bf16.msra.mxu0 %v884
        %1323 = vmatpush.bf16.msra.mxu0 %v880
        %1324 = vmatpush.bf16.msra.mxu0 %v876
        %1325 = vmatpush.bf16.msra.mxu0 %v872
        %1326 = vmatpush.bf16.msra.mxu0 %v868
        %1327 = vmatpush.bf16.msra.mxu0 %v864
        %1328 = vmatmul.bf16.gmra.mxu0 %v1319
        %v1329 = vpop.f32.mrf.mxu0
        %v1330 = vadd.f32 0.0, %v1329
        %v1331 = vpop.f32.mrf.mxu0
        %1332 = vdwg.mxu0
        %1333 = vmatpush.bf16.msra.mxu0 %v893
        %1334 = vmatpush.bf16.msra.mxu0 %v889
        %1335 = vmatpush.bf16.msra.mxu0 %v885
        %1336 = vmatpush.bf16.msra.mxu0 %v881
        %1337 = vmatpush.bf16.msra.mxu0 %v877
        %1338 = vmatpush.bf16.msra.mxu0 %v873
        %1339 = vmatpush.bf16.msra.mxu0 %v869
        %1340 = vmatpush.bf16.msra.mxu0 %v865
        %1341 = vmatmul.bf16.gmra.mxu0 %v1319
        %v1342 = vpop.f32.mrf.mxu0
        %v1343 = vadd.f32 0.0, %v1342
        %v1344 = vpop.f32.mrf.mxu0
        %1345 = vdwg.mxu0
        %1346 = vmatpush.bf16.msra.mxu0 %v894
        %1347 = vmatpush.bf16.msra.mxu0 %v890
        %1348 = vmatpush.bf16.msra.mxu0 %v886
        %1349 = vmatpush.bf16.msra.mxu0 %v882
        %1350 = vmatpush.bf16.msra.mxu0 %v878
        %1351 = vmatpush.bf16.msra.mxu0 %v874
        %1352 = vmatpush.bf16.msra.mxu0 %v870
        %1353 = vmatpush.bf16.msra.mxu0 %v866
        %1354 = vmatmul.bf16.gmra.mxu0 %v1319
        %v1355 = vpop.f32.mrf.mxu0
        %v1356 = vadd.f32 0.0, %v1355
        %v1357 = vpop.f32.mrf.mxu0
        %1358 = vdwg.mxu0
        %1359 = vmatpush.bf16.msra.mxu0 %v895
        %1360 = vmatpush.bf16.msra.mxu0 %v891
        %1361 = vmatpush.bf16.msra.mxu0 %v887
        %1362 = vmatpush.bf16.msra.mxu0 %v883
        %1363 = vmatpush.bf16.msra.mxu0 %v879
        %1364 = vmatpush.bf16.msra.mxu0 %v875
        %1365 = vmatpush.bf16.msra.mxu0 %v871
        %1366 = vmatpush.bf16.msra.mxu0 %v867
        %1367 = vmatmul.bf16.gmra.mxu0 %v1319
        %v1368 = vpop.f32.mrf.mxu0
        %v1369 = vadd.f32 0.0, %v1368
        %v1370 = vpop.f32.mrf.mxu0
        %1371 = vdwg.mxu0
        %v1372 = vadd.f32 %v1314, %v1330
        %v1373 = vadd.f32 %v1315, %v1343
        %v1374 = vadd.f32 %v1316, %v1356
        %v1375 = vadd.f32 %v1317, %v1369
        %v1376 = vxor.u32 %v1372, 2147483648
        %v1377 = vxor.u32 %v1373, 2147483648
        %v1378 = vxor.u32 %v1374, 2147483648
        %v1379 = vmul.f32 %v1376, 1.442695
        %v1380 = vpow.pop %v1379
        %v1381 = vmul.f32 %v1377, 1.442695
        %v1382 = vpow.pop %v1381
        %v1383 = vmul.f32 %v1378, 1.442695
        %v1384 = vpow.pop %v1383
        %v1385 = vadd.f32 %v1380, 1.0
        %v1386 = vadd.f32 %v1382, 1.0
        %v1387 = vadd.f32 %v1384, 1.0
        %v1388 = vrcp.pop %v1385
        %v1389 = vmul.f32 %v1385, %v1388
        %v1390 = vsub.f32 1.0, %v1389
        %v1391 = vmul.f32 %v1388, %v1390
        %v1392 = vadd.f32 %v1388, %v1391
        %vm1393 = vweird.f32 %v1385
        %vm1394 = vweird.f32 %v1388
        %vm1395 = vmor %vm1393, %vm1394
        %v1396 = vsel %vm1395, %v1388, %v1392
        %v1397 = vand.u32 2147483647, %v1385
        %vm1398 = vcmp.eq.f32.partialorder %v1397, 8.507059e+37
        %v1399 = vand.u32 %v1385, 2147483648
        %v1400 = vor.u32 1.1754944e-38, %v1399
        %v1401 = vsel %vm1398, %v1400, %v1396
        %v1402 = vmul.f32 1.0, %v1401
        %v1403 = vrcp.pop %v1386
        %v1404 = vmul.f32 %v1386, %v1403
        %v1405 = vsub.f32 1.0, %v1404
        %v1406 = vmul.f32 %v1403, %v1405
        %v1407 = vadd.f32 %v1403, %v1406
        %vm1408 = vweird.f32 %v1386
        %vm1409 = vweird.f32 %v1403
        %vm1410 = vmor %vm1408, %vm1409
        %v1411 = vsel %vm1410, %v1403, %v1407
        %v1412 = vand.u32 2147483647, %v1386
        %vm1413 = vcmp.eq.f32.partialorder %v1412, 8.507059e+37
        %v1414 = vand.u32 %v1386, 2147483648
        %v1415 = vor.u32 1.1754944e-38, %v1414
        %v1416 = vsel %vm1413, %v1415, %v1411
        %v1417 = vmul.f32 1.0, %v1416
        %v1418 = vrcp.pop %v1387
        %v1419 = vmul.f32 %v1387, %v1418
        %v1420 = vsub.f32 1.0, %v1419
        %v1421 = vmul.f32 %v1418, %v1420
        %v1422 = vadd.f32 %v1418, %v1421
        %vm1423 = vweird.f32 %v1387
        %vm1424 = vweird.f32 %v1418
        %vm1425 = vmor %vm1423, %vm1424
        %v1426 = vsel %vm1425, %v1418, %v1422
        %v1427 = vand.u32 2147483647, %v1387
        %vm1428 = vcmp.eq.f32.partialorder %v1427, 8.507059e+37
        %v1429 = vand.u32 %v1387, 2147483648
        %v1430 = vor.u32 1.1754944e-38, %v1429
        %v1431 = vsel %vm1428, %v1430, %v1426
        %v1432 = vmul.f32 1.0, %v1431
        %v1433 = vtanh.pop %v1375
        %v1434 = vld [vmem:[#allocation5] sm:$0xff]
        %v1435 = vmul.f32 %v1417, %v1434
        %v1436 = vmul.f32 %v1402, %v1433
        %v1437 = vadd.f32 %v1435, %v1436
        %v1438 = vtanh.pop %v1437
        %v1439 = vmul.f32 %v1432, %v1438
        %1440 = vst [vmem:[#allocation5] sm:$0xff] %v1437
        %1441 = vst [vmem:[#allocation4] sm:$0xff] %v1439
        %s1442 = scalar_lea.vmem [#allocation2], 24
        %1443 = vst [vmem:[%s1442] sm:$0xff] %v1439
        %s1444 = scalar_lea.vmem [#allocation3], 128
        %v1445 = vld [vmem:[%s1444] sm:$0xff]
        %v1446 = vld [vmem:[%s1444 + $0x8] sm:$0xff]
        %v1447 = vld [vmem:[%s1444 + $0x10] sm:$0xff]
        %v1448 = vld [vmem:[%s1444 + $0x18] sm:$0xff]
        %v1449 = vld [vmem:[#allocation4] sm:$0xff]
        %v1450 = vpack.c.bf16 %v1449, %v1449
        %1451 = vmatpush.bf16.msra.mxu0 %v892
        %1452 = vmatpush.bf16.msra.mxu0 %v888
        %1453 = vmatpush.bf16.msra.mxu0 %v884
        %1454 = vmatpush.bf16.msra.mxu0 %v880
        %1455 = vmatpush.bf16.msra.mxu0 %v876
        %1456 = vmatpush.bf16.msra.mxu0 %v872
        %1457 = vmatpush.bf16.msra.mxu0 %v868
        %1458 = vmatpush.bf16.msra.mxu0 %v864
        %1459 = vmatmul.bf16.gmra.mxu0 %v1450
        %v1460 = vpop.f32.mrf.mxu0
        %v1461 = vadd.f32 0.0, %v1460
        %v1462 = vpop.f32.mrf.mxu0
        %1463 = vdwg.mxu0
        %1464 = vmatpush.bf16.msra.mxu0 %v893
        %1465 = vmatpush.bf16.msra.mxu0 %v889
        %1466 = vmatpush.bf16.msra.mxu0 %v885
        %1467 = vmatpush.bf16.msra.mxu0 %v881
        %1468 = vmatpush.bf16.msra.mxu0 %v877
        %1469 = vmatpush.bf16.msra.mxu0 %v873
        %1470 = vmatpush.bf16.msra.mxu0 %v869
        %1471 = vmatpush.bf16.msra.mxu0 %v865
        %1472 = vmatmul.bf16.gmra.mxu0 %v1450
        %v1473 = vpop.f32.mrf.mxu0
        %v1474 = vadd.f32 0.0, %v1473
        %v1475 = vpop.f32.mrf.mxu0
        %1476 = vdwg.mxu0
        %1477 = vmatpush.bf16.msra.mxu0 %v894
        %1478 = vmatpush.bf16.msra.mxu0 %v890
        %1479 = vmatpush.bf16.msra.mxu0 %v886
        %1480 = vmatpush.bf16.msra.mxu0 %v882
        %1481 = vmatpush.bf16.msra.mxu0 %v878
        %1482 = vmatpush.bf16.msra.mxu0 %v874
        %1483 = vmatpush.bf16.msra.mxu0 %v870
        %1484 = vmatpush.bf16.msra.mxu0 %v866
        %1485 = vmatmul.bf16.gmra.mxu0 %v1450
        %v1486 = vpop.f32.mrf.mxu0
        %v1487 = vadd.f32 0.0, %v1486
        %v1488 = vpop.f32.mrf.mxu0
        %1489 = vdwg.mxu0
        %1490 = vmatpush.bf16.msra.mxu0 %v895
        %1491 = vmatpush.bf16.msra.mxu0 %v891
        %1492 = vmatpush.bf16.msra.mxu0 %v887
        %1493 = vmatpush.bf16.msra.mxu0 %v883
        %1494 = vmatpush.bf16.msra.mxu0 %v879
        %1495 = vmatpush.bf16.msra.mxu0 %v875
        %1496 = vmatpush.bf16.msra.mxu0 %v871
        %1497 = vmatpush.bf16.msra.mxu0 %v867
        %1498 = vmatmul.bf16.gmra.mxu0 %v1450
        %v1499 = vpop.f32.mrf.mxu0
        %v1500 = vadd.f32 0.0, %v1499
        %v1501 = vpop.f32.mrf.mxu0
        %1502 = vdwg.mxu0
        %v1503 = vadd.f32 %v1445, %v1461
        %v1504 = vadd.f32 %v1446, %v1474
        %v1505 = vadd.f32 %v1447, %v1487
        %v1506 = vadd.f32 %v1448, %v1500
        %v1507 = vxor.u32 %v1503, 2147483648
        %v1508 = vxor.u32 %v1504, 2147483648
        %v1509 = vxor.u32 %v1505, 2147483648
        %v1510 = vmul.f32 %v1507, 1.442695
        %v1511 = vpow.pop %v1510
        %v1512 = vmul.f32 %v1508, 1.442695
        %v1513 = vpow.pop %v1512
        %v1514 = vmul.f32 %v1509, 1.442695
        %v1515 = vpow.pop %v1514
        %v1516 = vadd.f32 %v1511, 1.0
        %v1517 = vadd.f32 %v1513, 1.0
        %v1518 = vadd.f32 %v1515, 1.0
        %v1519 = vrcp.pop %v1516
        %v1520 = vmul.f32 %v1516, %v1519
        %v1521 = vsub.f32 1.0, %v1520
        %v1522 = vmul.f32 %v1519, %v1521
        %v1523 = vadd.f32 %v1519, %v1522
        %vm1524 = vweird.f32 %v1516
        %vm1525 = vweird.f32 %v1519
        %vm1526 = vmor %vm1524, %vm1525
        %v1527 = vsel %vm1526, %v1519, %v1523
        %v1528 = vand.u32 2147483647, %v1516
        %vm1529 = vcmp.eq.f32.partialorder %v1528, 8.507059e+37
        %v1530 = vand.u32 %v1516, 2147483648
        %v1531 = vor.u32 1.1754944e-38, %v1530
        %v1532 = vsel %vm1529, %v1531, %v1527
        %v1533 = vmul.f32 1.0, %v1532
        %v1534 = vrcp.pop %v1517
        %v1535 = vmul.f32 %v1517, %v1534
        %v1536 = vsub.f32 1.0, %v1535
        %v1537 = vmul.f32 %v1534, %v1536
        %v1538 = vadd.f32 %v1534, %v1537
        %vm1539 = vweird.f32 %v1517
        %vm1540 = vweird.f32 %v1534
        %vm1541 = vmor %vm1539, %vm1540
        %v1542 = vsel %vm1541, %v1534, %v1538
        %v1543 = vand.u32 2147483647, %v1517
        %vm1544 = vcmp.eq.f32.partialorder %v1543, 8.507059e+37
        %v1545 = vand.u32 %v1517, 2147483648
        %v1546 = vor.u32 1.1754944e-38, %v1545
        %v1547 = vsel %vm1544, %v1546, %v1542
        %v1548 = vmul.f32 1.0, %v1547
        %v1549 = vrcp.pop %v1518
        %v1550 = vmul.f32 %v1518, %v1549
        %v1551 = vsub.f32 1.0, %v1550
        %v1552 = vmul.f32 %v1549, %v1551
        %v1553 = vadd.f32 %v1549, %v1552
        %vm1554 = vweird.f32 %v1518
        %vm1555 = vweird.f32 %v1549
        %vm1556 = vmor %vm1554, %vm1555
        %v1557 = vsel %vm1556, %v1549, %v1553
        %v1558 = vand.u32 2147483647, %v1518
        %vm1559 = vcmp.eq.f32.partialorder %v1558, 8.507059e+37
        %v1560 = vand.u32 %v1518, 2147483648
        %v1561 = vor.u32 1.1754944e-38, %v1560
        %v1562 = vsel %vm1559, %v1561, %v1557
        %v1563 = vmul.f32 1.0, %v1562
        %v1564 = vtanh.pop %v1506
        %v1565 = vld [vmem:[#allocation5] sm:$0xff]
        %v1566 = vmul.f32 %v1548, %v1565
        %v1567 = vmul.f32 %v1533, %v1564
        %v1568 = vadd.f32 %v1566, %v1567
        %v1569 = vtanh.pop %v1568
        %v1570 = vmul.f32 %v1563, %v1569
        %1571 = vst [vmem:[#allocation5] sm:$0xff] %v1568
        %1572 = vst [vmem:[#allocation4] sm:$0xff] %v1570
        %s1573 = scalar_lea.vmem [#allocation2], 32
        %1574 = vst [vmem:[%s1573] sm:$0xff] %v1570
        %s1575 = scalar_lea.vmem [#allocation3], 160
        %v1576 = vld [vmem:[%s1575] sm:$0xff]
        %v1577 = vld [vmem:[%s1575 + $0x8] sm:$0xff]
        %v1578 = vld [vmem:[%s1575 + $0x10] sm:$0xff]
        %v1579 = vld [vmem:[%s1575 + $0x18] sm:$0xff]
        %v1580 = vld [vmem:[#allocation4] sm:$0xff]
        %v1581 = vpack.c.bf16 %v1580, %v1580
        %1582 = vmatpush.bf16.msra.mxu0 %v892
        %1583 = vmatpush.bf16.msra.mxu0 %v888
        %1584 = vmatpush.bf16.msra.mxu0 %v884
        %1585 = vmatpush.bf16.msra.mxu0 %v880
        %1586 = vmatpush.bf16.msra.mxu0 %v876
        %1587 = vmatpush.bf16.msra.mxu0 %v872
        %1588 = vmatpush.bf16.msra.mxu0 %v868
        %1589 = vmatpush.bf16.msra.mxu0 %v864
        %1590 = vmatmul.bf16.gmra.mxu0 %v1581
        %v1591 = vpop.f32.mrf.mxu0
        %v1592 = vadd.f32 0.0, %v1591
        %v1593 = vpop.f32.mrf.mxu0
        %1594 = vdwg.mxu0
        %1595 = vmatpush.bf16.msra.mxu0 %v893
        %1596 = vmatpush.bf16.msra.mxu0 %v889
        %1597 = vmatpush.bf16.msra.mxu0 %v885
        %1598 = vmatpush.bf16.msra.mxu0 %v881
        %1599 = vmatpush.bf16.msra.mxu0 %v877
        %1600 = vmatpush.bf16.msra.mxu0 %v873
        %1601 = vmatpush.bf16.msra.mxu0 %v869
        %1602 = vmatpush.bf16.msra.mxu0 %v865
        %1603 = vmatmul.bf16.gmra.mxu0 %v1581
        %v1604 = vpop.f32.mrf.mxu0
        %v1605 = vadd.f32 0.0, %v1604
        %v1606 = vpop.f32.mrf.mxu0
        %1607 = vdwg.mxu0
        %1608 = vmatpush.bf16.msra.mxu0 %v894
        %1609 = vmatpush.bf16.msra.mxu0 %v890
        %1610 = vmatpush.bf16.msra.mxu0 %v886
        %1611 = vmatpush.bf16.msra.mxu0 %v882
        %1612 = vmatpush.bf16.msra.mxu0 %v878
        %1613 = vmatpush.bf16.msra.mxu0 %v874
        %1614 = vmatpush.bf16.msra.mxu0 %v870
        %1615 = vmatpush.bf16.msra.mxu0 %v866
        %1616 = vmatmul.bf16.gmra.mxu0 %v1581
        %v1617 = vpop.f32.mrf.mxu0
        %v1618 = vadd.f32 0.0, %v1617
        %v1619 = vpop.f32.mrf.mxu0
        %1620 = vdwg.mxu0
        %1621 = vmatpush.bf16.msra.mxu0 %v895
        %1622 = vmatpush.bf16.msra.mxu0 %v891
        %1623 = vmatpush.bf16.msra.mxu0 %v887
        %1624 = vmatpush.bf16.msra.mxu0 %v883
        %1625 = vmatpush.bf16.msra.mxu0 %v879
        %1626 = vmatpush.bf16.msra.mxu0 %v875
        %1627 = vmatpush.bf16.msra.mxu0 %v871
        %1628 = vmatpush.bf16.msra.mxu0 %v867
        %1629 = vmatmul.bf16.gmra.mxu0 %v1581
        %v1630 = vpop.f32.mrf.mxu0
        %v1631 = vadd.f32 0.0, %v1630
        %v1632 = vpop.f32.mrf.mxu0
        %1633 = vdwg.mxu0
        %v1634 = vadd.f32 %v1576, %v1592
        %v1635 = vadd.f32 %v1577, %v1605
        %v1636 = vadd.f32 %v1578, %v1618
        %v1637 = vadd.f32 %v1579, %v1631
        %v1638 = vxor.u32 %v1634, 2147483648
        %v1639 = vxor.u32 %v1635, 2147483648
        %v1640 = vxor.u32 %v1636, 2147483648
        %v1641 = vmul.f32 %v1638, 1.442695
        %v1642 = vpow.pop %v1641
        %v1643 = vmul.f32 %v1639, 1.442695
        %v1644 = vpow.pop %v1643
        %v1645 = vmul.f32 %v1640, 1.442695
        %v1646 = vpow.pop %v1645
        %v1647 = vadd.f32 %v1642, 1.0
        %v1648 = vadd.f32 %v1644, 1.0
        %v1649 = vadd.f32 %v1646, 1.0
        %v1650 = vrcp.pop %v1647
        %v1651 = vmul.f32 %v1647, %v1650
        %v1652 = vsub.f32 1.0, %v1651
        %v1653 = vmul.f32 %v1650, %v1652
        %v1654 = vadd.f32 %v1650, %v1653
        %vm1655 = vweird.f32 %v1647
        %vm1656 = vweird.f32 %v1650
        %vm1657 = vmor %vm1655, %vm1656
        %v1658 = vsel %vm1657, %v1650, %v1654
        %v1659 = vand.u32 2147483647, %v1647
        %vm1660 = vcmp.eq.f32.partialorder %v1659, 8.507059e+37
        %v1661 = vand.u32 %v1647, 2147483648
        %v1662 = vor.u32 1.1754944e-38, %v1661
        %v1663 = vsel %vm1660, %v1662, %v1658
        %v1664 = vmul.f32 1.0, %v1663
        %v1665 = vrcp.pop %v1648
        %v1666 = vmul.f32 %v1648, %v1665
        %v1667 = vsub.f32 1.0, %v1666
        %v1668 = vmul.f32 %v1665, %v1667
        %v1669 = vadd.f32 %v1665, %v1668
        %vm1670 = vweird.f32 %v1648
        %vm1671 = vweird.f32 %v1665
        %vm1672 = vmor %vm1670, %vm1671
        %v1673 = vsel %vm1672, %v1665, %v1669
        %v1674 = vand.u32 2147483647, %v1648
        %vm1675 = vcmp.eq.f32.partialorder %v1674, 8.507059e+37
        %v1676 = vand.u32 %v1648, 2147483648
        %v1677 = vor.u32 1.1754944e-38, %v1676
        %v1678 = vsel %vm1675, %v1677, %v1673
        %v1679 = vmul.f32 1.0, %v1678
        %v1680 = vrcp.pop %v1649
        %v1681 = vmul.f32 %v1649, %v1680
        %v1682 = vsub.f32 1.0, %v1681
        %v1683 = vmul.f32 %v1680, %v1682
        %v1684 = vadd.f32 %v1680, %v1683
        %vm1685 = vweird.f32 %v1649
        %vm1686 = vweird.f32 %v1680
        %vm1687 = vmor %vm1685, %vm1686
        %v1688 = vsel %vm1687, %v1680, %v1684
        %v1689 = vand.u32 2147483647, %v1649
        %vm1690 = vcmp.eq.f32.partialorder %v1689, 8.507059e+37
        %v1691 = vand.u32 %v1649, 2147483648
        %v1692 = vor.u32 1.1754944e-38, %v1691
        %v1693 = vsel %vm1690, %v1692, %v1688
        %v1694 = vmul.f32 1.0, %v1693
        %v1695 = vtanh.pop %v1637
        %v1696 = vld [vmem:[#allocation5] sm:$0xff]
        %v1697 = vmul.f32 %v1679, %v1696
        %v1698 = vmul.f32 %v1664, %v1695
        %v1699 = vadd.f32 %v1697, %v1698
        %v1700 = vtanh.pop %v1699
        %v1701 = vmul.f32 %v1694, %v1700
        %1702 = vst [vmem:[#allocation5] sm:$0xff] %v1699
        %1703 = vst [vmem:[#allocation4] sm:$0xff] %v1701
        %s1704 = scalar_lea.vmem [#allocation2], 40
        %1705 = vst [vmem:[%s1704] sm:$0xff] %v1701
        %s1706 = scalar_lea.vmem [#allocation3], 192
        %v1707 = vld [vmem:[%s1706] sm:$0xff]
        %v1708 = vld [vmem:[%s1706 + $0x8] sm:$0xff]
        %v1709 = vld [vmem:[%s1706 + $0x10] sm:$0xff]
        %v1710 = vld [vmem:[%s1706 + $0x18] sm:$0xff]
        %v1711 = vld [vmem:[#allocation4] sm:$0xff]
        %v1712 = vpack.c.bf16 %v1711, %v1711
        %1713 = vmatpush.bf16.msra.mxu0 %v892
        %1714 = vmatpush.bf16.msra.mxu0 %v888
        %1715 = vmatpush.bf16.msra.mxu0 %v884
        %1716 = vmatpush.bf16.msra.mxu0 %v880
        %1717 = vmatpush.bf16.msra.mxu0 %v876
        %1718 = vmatpush.bf16.msra.mxu0 %v872
        %1719 = vmatpush.bf16.msra.mxu0 %v868
        %1720 = vmatpush.bf16.msra.mxu0 %v864
        %1721 = vmatmul.bf16.gmra.mxu0 %v1712
        %v1722 = vpop.f32.mrf.mxu0
        %v1723 = vadd.f32 0.0, %v1722
        %v1724 = vpop.f32.mrf.mxu0
        %1725 = vdwg.mxu0
        %1726 = vmatpush.bf16.msra.mxu0 %v893
        %1727 = vmatpush.bf16.msra.mxu0 %v889
        %1728 = vmatpush.bf16.msra.mxu0 %v885
        %1729 = vmatpush.bf16.msra.mxu0 %v881
        %1730 = vmatpush.bf16.msra.mxu0 %v877
        %1731 = vmatpush.bf16.msra.mxu0 %v873
        %1732 = vmatpush.bf16.msra.mxu0 %v869
        %1733 = vmatpush.bf16.msra.mxu0 %v865
        %1734 = vmatmul.bf16.gmra.mxu0 %v1712
        %v1735 = vpop.f32.mrf.mxu0
        %v1736 = vadd.f32 0.0, %v1735
        %v1737 = vpop.f32.mrf.mxu0
        %1738 = vdwg.mxu0
        %1739 = vmatpush.bf16.msra.mxu0 %v894
        %1740 = vmatpush.bf16.msra.mxu0 %v890
        %1741 = vmatpush.bf16.msra.mxu0 %v886
        %1742 = vmatpush.bf16.msra.mxu0 %v882
        %1743 = vmatpush.bf16.msra.mxu0 %v878
        %1744 = vmatpush.bf16.msra.mxu0 %v874
        %1745 = vmatpush.bf16.msra.mxu0 %v870
        %1746 = vmatpush.bf16.msra.mxu0 %v866
        %1747 = vmatmul.bf16.gmra.mxu0 %v1712
        %v1748 = vpop.f32.mrf.mxu0
        %v1749 = vadd.f32 0.0, %v1748
        %v1750 = vpop.f32.mrf.mxu0
        %1751 = vdwg.mxu0
        %1752 = vmatpush.bf16.msra.mxu0 %v895
        %1753 = vmatpush.bf16.msra.mxu0 %v891
        %1754 = vmatpush.bf16.msra.mxu0 %v887
        %1755 = vmatpush.bf16.msra.mxu0 %v883
        %1756 = vmatpush.bf16.msra.mxu0 %v879
        %1757 = vmatpush.bf16.msra.mxu0 %v875
        %1758 = vmatpush.bf16.msra.mxu0 %v871
        %1759 = vmatpush.bf16.msra.mxu0 %v867
        %1760 = vmatmul.bf16.gmra.mxu0 %v1712
        %v1761 = vpop.f32.mrf.mxu0
        %v1762 = vadd.f32 0.0, %v1761
        %v1763 = vpop.f32.mrf.mxu0
        %1764 = vdwg.mxu0
        %v1765 = vadd.f32 %v1707, %v1723
        %v1766 = vadd.f32 %v1708, %v1736
        %v1767 = vadd.f32 %v1709, %v1749
        %v1768 = vadd.f32 %v1710, %v1762
        %v1769 = vxor.u32 %v1765, 2147483648
        %v1770 = vxor.u32 %v1766, 2147483648
        %v1771 = vxor.u32 %v1767, 2147483648
        %v1772 = vmul.f32 %v1769, 1.442695
        %v1773 = vpow.pop %v1772
        %v1774 = vmul.f32 %v1770, 1.442695
        %v1775 = vpow.pop %v1774
        %v1776 = vmul.f32 %v1771, 1.442695
        %v1777 = vpow.pop %v1776
        %v1778 = vadd.f32 %v1773, 1.0
        %v1779 = vadd.f32 %v1775, 1.0
        %v1780 = vadd.f32 %v1777, 1.0
        %v1781 = vrcp.pop %v1778
        %v1782 = vmul.f32 %v1778, %v1781
        %v1783 = vsub.f32 1.0, %v1782
        %v1784 = vmul.f32 %v1781, %v1783
        %v1785 = vadd.f32 %v1781, %v1784
        %vm1786 = vweird.f32 %v1778
        %vm1787 = vweird.f32 %v1781
        %vm1788 = vmor %vm1786, %vm1787
        %v1789 = vsel %vm1788, %v1781, %v1785
        %v1790 = vand.u32 2147483647, %v1778
        %vm1791 = vcmp.eq.f32.partialorder %v1790, 8.507059e+37
        %v1792 = vand.u32 %v1778, 2147483648
        %v1793 = vor.u32 1.1754944e-38, %v1792
        %v1794 = vsel %vm1791, %v1793, %v1789
        %v1795 = vmul.f32 1.0, %v1794
        %v1796 = vrcp.pop %v1779
        %v1797 = vmul.f32 %v1779, %v1796
        %v1798 = vsub.f32 1.0, %v1797
        %v1799 = vmul.f32 %v1796, %v1798
        %v1800 = vadd.f32 %v1796, %v1799
        %vm1801 = vweird.f32 %v1779
        %vm1802 = vweird.f32 %v1796
        %vm1803 = vmor %vm1801, %vm1802
        %v1804 = vsel %vm1803, %v1796, %v1800
        %v1805 = vand.u32 2147483647, %v1779
        %vm1806 = vcmp.eq.f32.partialorder %v1805, 8.507059e+37
        %v1807 = vand.u32 %v1779, 2147483648
        %v1808 = vor.u32 1.1754944e-38, %v1807
        %v1809 = vsel %vm1806, %v1808, %v1804
        %v1810 = vmul.f32 1.0, %v1809
        %v1811 = vrcp.pop %v1780
        %v1812 = vmul.f32 %v1780, %v1811
        %v1813 = vsub.f32 1.0, %v1812
        %v1814 = vmul.f32 %v1811, %v1813
        %v1815 = vadd.f32 %v1811, %v1814
        %vm1816 = vweird.f32 %v1780
        %vm1817 = vweird.f32 %v1811
        %vm1818 = vmor %vm1816, %vm1817
        %v1819 = vsel %vm1818, %v1811, %v1815
        %v1820 = vand.u32 2147483647, %v1780
        %vm1821 = vcmp.eq.f32.partialorder %v1820, 8.507059e+37
        %v1822 = vand.u32 %v1780, 2147483648
        %v1823 = vor.u32 1.1754944e-38, %v1822
        %v1824 = vsel %vm1821, %v1823, %v1819
        %v1825 = vmul.f32 1.0, %v1824
        %v1826 = vtanh.pop %v1768
        %v1827 = vld [vmem:[#allocation5] sm:$0xff]
        %v1828 = vmul.f32 %v1810, %v1827
        %v1829 = vmul.f32 %v1795, %v1826
        %v1830 = vadd.f32 %v1828, %v1829
        %v1831 = vtanh.pop %v1830
        %v1832 = vmul.f32 %v1825, %v1831
        %1833 = vst [vmem:[#allocation5] sm:$0xff] %v1830
        %1834 = vst [vmem:[#allocation4] sm:$0xff] %v1832
        %s1835 = scalar_lea.vmem [#allocation2], 48
        %1836 = vst [vmem:[%s1835] sm:$0xff] %v1832
        %s1837 = scalar_lea.vmem [#allocation3], 224
        %v1838 = vld [vmem:[%s1837] sm:$0xff]
        %v1839 = vld [vmem:[%s1837 + $0x8] sm:$0xff]
        %v1840 = vld [vmem:[%s1837 + $0x10] sm:$0xff]
        %v1841 = vld [vmem:[%s1837 + $0x18] sm:$0xff]
        %v1842 = vld [vmem:[#allocation4] sm:$0xff]
        %v1843 = vpack.c.bf16 %v1842, %v1842
        %1844 = vmatpush.bf16.msra.mxu0 %v892
        %1845 = vmatpush.bf16.msra.mxu0 %v888
        %1846 = vmatpush.bf16.msra.mxu0 %v884
        %1847 = vmatpush.bf16.msra.mxu0 %v880
        %1848 = vmatpush.bf16.msra.mxu0 %v876
        %1849 = vmatpush.bf16.msra.mxu0 %v872
        %1850 = vmatpush.bf16.msra.mxu0 %v868
        %1851 = vmatpush.bf16.msra.mxu0 %v864
        %1852 = vmatmul.bf16.gmra.mxu0 %v1843
        %v1853 = vpop.f32.mrf.mxu0
        %v1854 = vadd.f32 0.0, %v1853
        %v1855 = vpop.f32.mrf.mxu0
        %1856 = vdwg.mxu0
        %1857 = vmatpush.bf16.msra.mxu0 %v893
        %1858 = vmatpush.bf16.msra.mxu0 %v889
        %1859 = vmatpush.bf16.msra.mxu0 %v885
        %1860 = vmatpush.bf16.msra.mxu0 %v881
        %1861 = vmatpush.bf16.msra.mxu0 %v877
        %1862 = vmatpush.bf16.msra.mxu0 %v873
        %1863 = vmatpush.bf16.msra.mxu0 %v869
        %1864 = vmatpush.bf16.msra.mxu0 %v865
        %1865 = vmatmul.bf16.gmra.mxu0 %v1843
        %v1866 = vpop.f32.mrf.mxu0
        %v1867 = vadd.f32 0.0, %v1866
        %v1868 = vpop.f32.mrf.mxu0
        %1869 = vdwg.mxu0
        %1870 = vmatpush.bf16.msra.mxu0 %v894
        %1871 = vmatpush.bf16.msra.mxu0 %v890
        %1872 = vmatpush.bf16.msra.mxu0 %v886
        %1873 = vmatpush.bf16.msra.mxu0 %v882
        %1874 = vmatpush.bf16.msra.mxu0 %v878
        %1875 = vmatpush.bf16.msra.mxu0 %v874
        %1876 = vmatpush.bf16.msra.mxu0 %v870
        %1877 = vmatpush.bf16.msra.mxu0 %v866
        %1878 = vmatmul.bf16.gmra.mxu0 %v1843
        %v1879 = vpop.f32.mrf.mxu0
        %v1880 = vadd.f32 0.0, %v1879
        %v1881 = vpop.f32.mrf.mxu0
        %1882 = vdwg.mxu0
        %1883 = vmatpush.bf16.msra.mxu0 %v895
        %1884 = vmatpush.bf16.msra.mxu0 %v891
        %1885 = vmatpush.bf16.msra.mxu0 %v887
        %1886 = vmatpush.bf16.msra.mxu0 %v883
        %1887 = vmatpush.bf16.msra.mxu0 %v879
        %1888 = vmatpush.bf16.msra.mxu0 %v875
        %1889 = vmatpush.bf16.msra.mxu0 %v871
        %1890 = vmatpush.bf16.msra.mxu0 %v867
        %1891 = vmatmul.bf16.gmra.mxu0 %v1843
        %v1892 = vpop.f32.mrf.mxu0
        %v1893 = vadd.f32 0.0, %v1892
        %v1894 = vpop.f32.mrf.mxu0
        %1895 = vdwg.mxu0
        %v1896 = vadd.f32 %v1838, %v1854
        %v1897 = vadd.f32 %v1839, %v1867
        %v1898 = vadd.f32 %v1840, %v1880
        %v1899 = vadd.f32 %v1841, %v1893
        %v1900 = vxor.u32 %v1896, 2147483648
        %v1901 = vxor.u32 %v1897, 2147483648
        %v1902 = vxor.u32 %v1898, 2147483648
        %v1903 = vmul.f32 %v1900, 1.442695
        %v1904 = vpow.pop %v1903
        %v1905 = vmul.f32 %v1901, 1.442695
        %v1906 = vpow.pop %v1905
        %v1907 = vmul.f32 %v1902, 1.442695
        %v1908 = vpow.pop %v1907
        %v1909 = vadd.f32 %v1904, 1.0
        %v1910 = vadd.f32 %v1906, 1.0
        %v1911 = vadd.f32 %v1908, 1.0
        %v1912 = vrcp.pop %v1909
        %v1913 = vmul.f32 %v1909, %v1912
        %v1914 = vsub.f32 1.0, %v1913
        %v1915 = vmul.f32 %v1912, %v1914
        %v1916 = vadd.f32 %v1912, %v1915
        %vm1917 = vweird.f32 %v1909
        %vm1918 = vweird.f32 %v1912
        %vm1919 = vmor %vm1917, %vm1918
        %v1920 = vsel %vm1919, %v1912, %v1916
        %v1921 = vand.u32 2147483647, %v1909
        %vm1922 = vcmp.eq.f32.partialorder %v1921, 8.507059e+37
        %v1923 = vand.u32 %v1909, 2147483648
        %v1924 = vor.u32 1.1754944e-38, %v1923
        %v1925 = vsel %vm1922, %v1924, %v1920
        %v1926 = vmul.f32 1.0, %v1925
        %v1927 = vrcp.pop %v1910
        %v1928 = vmul.f32 %v1910, %v1927
        %v1929 = vsub.f32 1.0, %v1928
        %v1930 = vmul.f32 %v1927, %v1929
        %v1931 = vadd.f32 %v1927, %v1930
        %vm1932 = vweird.f32 %v1910
        %vm1933 = vweird.f32 %v1927
        %vm1934 = vmor %vm1932, %vm1933
        %v1935 = vsel %vm1934, %v1927, %v1931
        %v1936 = vand.u32 2147483647, %v1910
        %vm1937 = vcmp.eq.f32.partialorder %v1936, 8.507059e+37
        %v1938 = vand.u32 %v1910, 2147483648
        %v1939 = vor.u32 1.1754944e-38, %v1938
        %v1940 = vsel %vm1937, %v1939, %v1935
        %v1941 = vmul.f32 1.0, %v1940
        %v1942 = vrcp.pop %v1911
        %v1943 = vmul.f32 %v1911, %v1942
        %v1944 = vsub.f32 1.0, %v1943
        %v1945 = vmul.f32 %v1942, %v1944
        %v1946 = vadd.f32 %v1942, %v1945
        %vm1947 = vweird.f32 %v1911
        %vm1948 = vweird.f32 %v1942
        %vm1949 = vmor %vm1947, %vm1948
        %v1950 = vsel %vm1949, %v1942, %v1946
        %v1951 = vand.u32 2147483647, %v1911
        %vm1952 = vcmp.eq.f32.partialorder %v1951, 8.507059e+37
        %v1953 = vand.u32 %v1911, 2147483648
        %v1954 = vor.u32 1.1754944e-38, %v1953
        %v1955 = vsel %vm1952, %v1954, %v1950
        %v1956 = vmul.f32 1.0, %v1955
        %v1957 = vtanh.pop %v1899
        %v1958 = vld [vmem:[#allocation5] sm:$0xff]
        %v1959 = vmul.f32 %v1941, %v1958
        %v1960 = vmul.f32 %v1926, %v1957
        %v1961 = vadd.f32 %v1959, %v1960
        %v1962 = vtanh.pop %v1961
        %v1963 = vmul.f32 %v1956, %v1962
        %1964 = vst [vmem:[#allocation5] sm:$0xff] %v1961
        %1965 = vst [vmem:[#allocation4] sm:$0xff] %v1963
        %s1966 = scalar_lea.vmem [#allocation2], 56
        %1967 = vst [vmem:[%s1966] sm:$0xff] %v1963
        %p1968 = scmp.eq.s32.totalorder %s23, 2
        // Predicated region
        $region57: #{lstm_model_forward.1} parent=43 // pred_check
          %p1969 = pneg %p1968
        $region58: #{lstm_model_forward.1} parent=43 // pred_check_branch
          %1971 = sbr.rel (%p1969) target = $region60
        $region59: #{lstm_model_forward.1} parent=43 // pred_region
          %v1972 = vld [vmem:[#allocation2] sm:$0xff]
          %v1973 = vld [vmem:[#allocation2 + $0x8] sm:$0xff]
          %v1974 = vld [vmem:[#allocation2 + $0x10] sm:$0xff]
          %v1975 = vld [vmem:[#allocation2 + $0x18] sm:$0xff]
          %v1976 = vld [vmem:[#allocation2 + $0x20] sm:$0xff]
          %v1977 = vld [vmem:[#allocation2 + $0x28] sm:$0xff]
          %v1978 = vld [vmem:[#allocation2 + $0x30] sm:$0xff]
          %v1979 = vld [vmem:[#allocation2 + $0x38] sm:$0xff]
          %v1980 = vpack.c.bf16 %v1972, %v1972
          %v1981 = vpack.c.bf16 %v1973, %v1973
          %v1982 = vpack.c.bf16 %v1974, %v1974
          %v1983 = vpack.c.bf16 %v1975, %v1975
          %v1984 = vpack.c.bf16 %v1976, %v1976
          %v1985 = vpack.c.bf16 %v1977, %v1977
          %v1986 = vpack.c.bf16 %v1978, %v1978
          %v1987 = vpack.c.bf16 %v1979, %v1979
          %v1988 = vld [vmem:[%s4] sm:$0xf]
          %v1989 = vld [vmem:[%s4 + $0x4] sm:$0xf]
          %v1990 = vld [vmem:[%s4 + $0x8] sm:$0xf]
          %v1991 = vld [vmem:[%s4 + $0xc] sm:$0xf]
          %v1992 = vld [vmem:[%s4 + $0x10] sm:$0xf]
          %v1993 = vld [vmem:[%s4 + $0x14] sm:$0xf]
          %v1994 = vld [vmem:[%s4 + $0x18] sm:$0xf]
          %v1995 = vld [vmem:[%s4 + $0x1c] sm:$0xf]
          %v1996 = vld [vmem:[%s4 + $0x20] sm:$0xf]
          %v1997 = vld [vmem:[%s4 + $0x24] sm:$0xf]
          %v1998 = vld [vmem:[%s4 + $0x28] sm:$0xf]
          %v1999 = vld [vmem:[%s4 + $0x2c] sm:$0xf]
          %v2000 = vld [vmem:[%s4 + $0x30] sm:$0xf]
          %v2001 = vld [vmem:[%s4 + $0x34] sm:$0xf]
          %v2002 = vld [vmem:[%s4 + $0x38] sm:$0xf]
          %v2003 = vld [vmem:[%s4 + $0x3c] sm:$0xf]
          %v2004 = vld [vmem:[%s5] sm:$0x1]
          %v2006 = vperm.slane %v2004, 0
          %v2016 = vunpack.c.l.b16 %v1980
          %v2017 = vunpack.c.l.b16 %v1981
          %v2018 = vunpack.c.l.b16 %v1982
          %v2019 = vunpack.c.l.b16 %v1983
          %v2020 = vunpack.c.l.b16 %v1984
          %v2021 = vunpack.c.l.b16 %v1985
          %v2022 = vunpack.c.l.b16 %v1986
          %v2023 = vunpack.c.l.b16 %v1987
          %v2024 = vpack.c.b16 %v2017, %v2016
          %v2025 = vpack.c.b16 %v2019, %v2018
          %v2026 = vpack.c.b16 %v2021, %v2020
          %v2027 = vpack.c.b16 %v2023, %v2022
          %v2048 = vunpack.c.l.b16 %v1988
          %v2049 = vunpack.c.l.b16 %v1989
          %v2050 = vunpack.c.l.b16 %v1990
          %v2051 = vunpack.c.l.b16 %v1991
          %v2052 = vunpack.c.l.b16 %v1992
          %v2053 = vunpack.c.l.b16 %v1993
          %v2054 = vunpack.c.l.b16 %v1994
          %v2055 = vunpack.c.l.b16 %v1995
          %v2056 = vunpack.c.l.b16 %v1996
          %v2057 = vunpack.c.l.b16 %v1997
          %v2058 = vunpack.c.l.b16 %v1998
          %v2059 = vunpack.c.l.b16 %v1999
          %v2060 = vunpack.c.l.b16 %v2000
          %v2061 = vunpack.c.l.b16 %v2001
          %v2062 = vunpack.c.l.b16 %v2002
          %v2063 = vunpack.c.l.b16 %v2003
          %v2064 = vpack.c.b16 %v2049, %v2048
          %v2065 = vpack.c.b16 %v2051, %v2050
          %v2066 = vpack.c.b16 %v2053, %v2052
          %v2067 = vpack.c.b16 %v2055, %v2054
          %v2068 = vpack.c.b16 %v2057, %v2056
          %v2069 = vpack.c.b16 %v2059, %v2058
          %v2070 = vpack.c.b16 %v2061, %v2060
          %v2071 = vpack.c.b16 %v2063, %v2062
          %2080 = vmatpush.bf16.msra.mxu0 %v2071
          %2081 = vmatpush.bf16.msra.mxu0 %v2070
          %2082 = vmatpush.bf16.msra.mxu0 %v2069
          %2083 = vmatpush.bf16.msra.mxu0 %v2068
          %2084 = vmatpush.bf16.msra.mxu0 %v2067
          %2085 = vmatpush.bf16.msra.mxu0 %v2066
          %2086 = vmatpush.bf16.msra.mxu0 %v2065
          %2087 = vmatpush.bf16.msra.mxu0 %v2064
          %2088 = vmatmul.bf16.gmra.mxu0 %v2024
          %v2089 = vpop.f32.mrf.mxu0
          %v2090 = vadd.f32 %v2006, %v2089
          %v2091 = vpop.f32.mrf.mxu0
          %v2092 = vadd.f32 %v2006, %v2091
          %2093 = vmatmul.bf16.gmra.mxu0 %v2025
          %v2094 = vpop.f32.mrf.mxu0
          %v2095 = vadd.f32 %v2006, %v2094
          %v2096 = vpop.f32.mrf.mxu0
          %v2097 = vadd.f32 %v2006, %v2096
          %2098 = vmatmul.bf16.gmra.mxu0 %v2026
          %v2099 = vpop.f32.mrf.mxu0
          %v2100 = vadd.f32 %v2006, %v2099
          %v2101 = vpop.f32.mrf.mxu0
          %v2102 = vadd.f32 %v2006, %v2101
          %2103 = vmatmul.bf16.gmra.mxu0 %v2027
          %v2104 = vpop.f32.mrf.mxu0
          %v2105 = vadd.f32 %v2006, %v2104
          %v2106 = vpop.f32.mrf.mxu0
          %v2107 = vadd.f32 %v2006, %v2106
          %2108 = vdwg.mxu0
          %2109 = vst [vmem:[%s6] sm:$0xff] %v2090
          %2110 = vst [vmem:[%s6 + $0x8] sm:$0xff] %v2092
          %2111 = vst [vmem:[%s6 + $0x10] sm:$0xff] %v2095
          %2112 = vst [vmem:[%s6 + $0x18] sm:$0xff] %v2097
          %2113 = vst [vmem:[%s6 + $0x20] sm:$0xff] %v2100
          %2114 = vst [vmem:[%s6 + $0x28] sm:$0xff] %v2102
          %2115 = vst [vmem:[%s6 + $0x30] sm:$0xff] %v2105
          %2116 = vst [vmem:[%s6 + $0x38] sm:$0xff] %v2107
        $region60: #{lstm_model_forward.1} parent=43 // pred_fallthru
          _
        // Predicated region
        $region61: #{lstm_model_forward.1} parent=43 // pred_check
          %p2117 = pneg %p177
        $region62: #{lstm_model_forward.1} parent=43 // pred_check_branch
          %2119 = sbr.rel (%p2117) target = $region64
        $region63: #{lstm_model_forward.1} parent=43 // pred_region
          _
        $region64: #{lstm_model_forward.1} parent=43 // pred_fallthru
          _
        // Predicated region
        $region65: #{lstm_model_forward.1} parent=43 // pred_check
          %p2120 = pneg %p177
        $region66: #{lstm_model_forward.1} parent=43 // pred_check_branch
          %2122 = sbr.rel (%p2120) target = $region68
        $region67: #{lstm_model_forward.1} parent=43 // pred_region
          _
        $region68: #{lstm_model_forward.1} parent=43 // pred_fallthru
          _
      $region44: #{lstm_model_forward.1} parent=5 // pred_fallthru
        _
      %p2123 = scmp.le.s32.totalorder 2, %s18
      // Predicated region
      $region69: #{lstm_model_forward.1} parent=5 // pred_check
        %p2124 = pneg %p2123
      $region70: #{lstm_model_forward.1} parent=5 // pred_check_branch
        %2126 = sbr.rel (%p2124) target = $region72
      $region71: #{lstm_model_forward.1} parent=5 // pred_region
        %s2127 = ssub.s32 %s18, 2
      $region72: #{lstm_model_forward.1} parent=5 // pred_fallthru
        _
    $region6: #{lstm_model_forward.1} parent=1 // loop_footer
      %s22 = sadd.s32 1, %s18
    $region7: #{lstm_model_forward.1} parent=1 // loop_footer_branch
      %17 = sbr.rel target = $region3
    $region8: #{lstm_model_forward.1} parent=1 // loop_exit
      _
    %2128 = vsyncpa [#allocation7], 1
    %s2129 = scalar_lea.sflag [#allocation7], 1
    %2130 = vsyncpa %s2129, 1
    %2131 = vsyncpa [#allocation9], 1
    %s2132 = scalar_lea.sflag [#allocation9], 1
    %2133 = vsyncpa %s2132, 1

</llo_original>
